<compile_context>
chip_gen: v5e
topology: v5e:2x2
jax: 0.10.0
libtpu: 0.0.40
codegen_flags: <defaults>
</compile_context>

<pallas_src>
import jax
import jax.numpy as jnp
from jax.experimental import pallas as pl
from jax.experimental.pallas import tpu as pltpu


IN_FEATURES = 89
HIDDEN1 = 1028
HIDDEN2 = 1152
OUT_FEATURES = 5

K_PAD = 128      # input feature dim zero-padded 89 -> 128 (lane aligned)
H1_PAD = 1152    # hidden1 zero-padded 1028 -> 1152 (= 9 * 128, lane/MXU aligned)
LEAKY_SLOPE = 0.01


def mlp_kernel(x_ref, w1_ref, b1_ref, w2_ref, b2_ref, w3_ref, b3_ref,
               o_ref, acc_ref):
    k = pl.program_id(1)

    @pl.when(k == 0)
    def _():
        acc_ref[...] = jnp.zeros_like(acc_ref)

    # layer 1 (one H1 chunk): (tb,128)bf16 @ (128,ch)bf16 -> f32 acc on MXU
    v1 = jnp.dot(x_ref[...], w1_ref[...],
                 preferred_element_type=jnp.float32) + b1_ref[...]
    # LeakyReLU(0.01): max(v, 0.01*v) == where(v>0, v, 0.01*v)
    v4 = jnp.maximum(v1, v1 * LEAKY_SLOPE)

    # layer 2 partial sum over H1 chunks (f32 accumulator scratch);
    # only the MXU operand is cast to bf16.
    acc_ref[...] += jnp.dot(v4.astype(jnp.bfloat16), w2_ref[...],
                            preferred_element_type=jnp.float32)

    @pl.when(k == pl.num_programs(1) - 1)
    def _():
        t1 = acc_ref[...] + b2_ref[...]
        t4 = jnp.maximum(t1, t1 * LEAKY_SLOPE)
        # layer 3
        o_ref[...] = jnp.dot(t4.astype(jnp.bfloat16), w3_ref[...],
                             preferred_element_type=jnp.float32) + b3_ref[...]


def _round_up(x, m):
    return -(-x // m) * m


def _choose_tile_b(batch):
    if batch <= 8:
        return batch  # single tile; block equals the (padded) full batch dim
    # >= 2 grid steps so the "parallel" batch axis can shard across v7x's two
    # TensorCores; cap at 256 (fills the 256-wide MXU on v6e/v7x and keeps
    # the ~0.35us per-step pipeline overhead amortized).
    half = _round_up(-(-batch // 2), 8)
    return min(256, half)


def mlp_forward(x, w1, b1, w2, b2, w3, b3):
    """x: (B, 89) f32. Params are the output of prepare_params()."""
    batch = x.shape[0]
    k_pad, h1 = w1.shape           # (128, 1152)
    h2 = w2.shape[1]               # 1152
    out_f = w3.shape[1]            # 5

    # Pad input features (89 -> 128); x is tiny so the extra bytes are noise.
    x = x.astype(jnp.float32)
    if x.shape[1] < k_pad:
        x = jnp.pad(x, ((0, 0), (0, k_pad - x.shape[1])))

    tile_b = _choose_tile_b(batch)
    bp = _round_up(batch, tile_b)
    if bp != batch:
        x = jnp.pad(x, ((0, bp - batch), (0, 0)))
    x = x.astype(jnp.bfloat16)

    n_batch_tiles = bp // tile_b
    # Single batch tile -> chunk H1 (3 x 384) so weight-chunk DMA overlaps the
    # previous chunk's compute.  Multiple batch tiles -> 1 chunk so the weight
    # blocks are grid-invariant and stay resident in VMEM across batch tiles.
    n_chunks = 3 if n_batch_tiles == 1 else 1
    chunk_h1 = h1 // n_chunks
    grid = (n_batch_tiles, n_chunks)

    flops = 2 * bp * (k_pad * h1 + h1 * h2 + h2 * out_f)
    bytes_accessed = (
        x.size * 2                              # bf16 activations in
        + (w1.size + w2.size + w3.size) * 2     # bf16 weights
        + (b1.size + b2.size + b3.size) * 4     # f32 biases
        + bp * out_f * 4                        # f32 output
    )

    out = pl.pallas_call(
        mlp_kernel,
        out_shape=jax.ShapeDtypeStruct((bp, out_f), jnp.float32),
        grid_spec=pltpu.PrefetchScalarGridSpec(
            num_scalar_prefetch=0,
            grid=grid,
            in_specs=[
                pl.BlockSpec((tile_b, k_pad), lambda i, k: (i, 0)),    # x tile
                pl.BlockSpec((k_pad, chunk_h1), lambda i, k: (0, k)),  # W1 chunk
                pl.BlockSpec((1, chunk_h1), lambda i, k: (0, k)),      # b1 chunk
                pl.BlockSpec((chunk_h1, h2), lambda i, k: (k, 0)),     # W2 chunk
                pl.BlockSpec((1, h2), lambda i, k: (0, 0)),            # b2
                pl.BlockSpec((h2, out_f), lambda i, k: (0, 0)),        # W3
                pl.BlockSpec((1, out_f), lambda i, k: (0, 0)),         # b3
            ],
            out_specs=pl.BlockSpec((tile_b, out_f), lambda i, k: (i, 0)),
            scratch_shapes=[pltpu.VMEM((tile_b, h2), jnp.float32)],
        ),
        compiler_params=pltpu.CompilerParams(
            dimension_semantics=("parallel", "arbitrary")),
        cost_estimate=pl.CostEstimate(
            flops=flops, transcendentals=0, bytes_accessed=bytes_accessed),
    )(x, w1, b1, w2, b2, w3, b3)
    return out[:batch]


def init_linear_params(key, in_features, out_features):
    """PyTorch nn.Linear-style init (uniform +/- 1/sqrt(fan_in)).

    Weight in (in_features, out_features) layout, bias as (1, out_features).
    """
    kw, kb = jax.random.split(key)
    bound = 1.0 / (in_features ** 0.5)
    w = jax.random.uniform(kw, (in_features, out_features), jnp.float32,
                           minval=-bound, maxval=bound)
    b = jax.random.uniform(kb, (1, out_features), jnp.float32,
                           minval=-bound, maxval=bound)
    return w, b


def prepare_params(w1, b1, w2, b2, w3, b3):
    """One-time offline prep: zero-pad K (89->128) and H1 (1028->1152), cast
    weights to bf16 (biases stay f32).  Zero b1 columns + zero W2 rows keep
    the padded H1 channels exactly inert through the LeakyReLU."""
    w1p = jnp.pad(w1, ((0, K_PAD - w1.shape[0]), (0, H1_PAD - w1.shape[1])))
    b1p = jnp.pad(b1, ((0, 0), (0, H1_PAD - b1.shape[1])))
    w2p = jnp.pad(w2, ((0, H1_PAD - w2.shape[0]), (0, 0)))
    return (w1p.astype(jnp.bfloat16), b1p.astype(jnp.float32),
            w2p.astype(jnp.bfloat16), b2.astype(jnp.float32),
            w3.astype(jnp.bfloat16), b3.astype(jnp.float32))


def reference_forward_fp32(x, w1, b1, w2, b2, w3, b3):
    """Pure-fp32 reference matching the torch Model semantics."""
    v1 = x @ w1 + b1
    v4 = jnp.where(v1 > 0, v1, v1 * LEAKY_SLOPE)
    t1 = v4 @ w2 + b2
    t4 = jnp.where(t1 > 0, t1, t1 * LEAKY_SLOPE)
    return t4 @ w3 + b3


def reference_forward_mixed(x, w1_bf, b1, w2_bf, b2, w3_bf, b3):
    """Pure-JAX mirror of the kernel's bf16-weight / f32-accumulate math."""
    k_pad = w1_bf.shape[0]
    xp = jnp.pad(x.astype(jnp.float32), ((0, 0), (0, k_pad - x.shape[1])))
    xb = xp.astype(jnp.bfloat16)
    v1 = jnp.dot(xb, w1_bf, preferred_element_type=jnp.float32) + b1
    v4 = jnp.maximum(v1, v1 * LEAKY_SLOPE)
    t1 = jnp.dot(v4.astype(jnp.bfloat16), w2_bf,
                 preferred_element_type=jnp.float32) + b2
    t4 = jnp.maximum(t1, t1 * LEAKY_SLOPE)
    return jnp.dot(t4.astype(jnp.bfloat16), w3_bf,
                   preferred_element_type=jnp.float32) + b3


if __name__ == "__main__":
    key = jax.random.PRNGKey(0)
    k_x, k1, k2, k3 = jax.random.split(key, 4)

    # Input matches the module: x1 = torch.randn(1, 89)
    x = jax.random.normal(k_x, (1, IN_FEATURES), jnp.float32)

    w1, b1 = init_linear_params(k1, IN_FEATURES, HIDDEN1)
    w2, b2 = init_linear_params(k2, HIDDEN1, HIDDEN2)
    w3, b3 = init_linear_params(k3, HIDDEN2, OUT_FEATURES)

    params_bf16 = prepare_params(w1, b1, w2, b2, w3, b3)

    # --- batch = 1 (module's shape): single batch tile, H1 chunked (overlap)
    out = jax.block_until_ready(mlp_forward(x, *params_bf16))
    assert out.shape == (1, OUT_FEATURES)

    # Check 1: kernel vs pure-JAX reference with the SAME bf16 quantization.
    ref_mixed = reference_forward_mixed(x, *params_bf16)
    assert jnp.allclose(out, ref_mixed, atol=1e-3, rtol=1e-3), \
        "mismatch vs bf16 reference"

    # Check 2: kernel vs full-fp32 reference (torch Model semantics); looser
    # tolerance covers the intentional bf16 weight/activation quantization.
    ref_fp32 = reference_forward_fp32(x, w1, b1, w2, b2, w3, b3)
    assert jnp.allclose(out, ref_fp32, atol=5e-2, rtol=5e-2), \
        "mismatch vs fp32 reference"

    # --- batch = 24: exercises the multi-tile resident-weight path and the
    # batch padding / un-padding.
    xb = jax.random.normal(k_x, (24, IN_FEATURES), jnp.float32)
    outb = jax.block_until_ready(mlp_forward(xb, *params_bf16))
    refb = reference_forward_mixed(xb, *params_bf16)
    assert outb.shape == (24, OUT_FEATURES)
    assert jnp.allclose(outb, refb, atol=1e-3, rtol=1e-3), \
        "batched mismatch vs bf16 reference"

    print("KERNEL_OK")
</pallas_src>

<mosaic_0001>
module attributes {stable_mosaic.version = 11 : i64} {
  func.func @mlp_kernel(%arg0: i32, %arg1: i32, %arg2: memref<1x128xbf16, #tpu.memory_space<vmem>>, %arg3: memref<128x384xbf16, #tpu.memory_space<vmem>>, %arg4: memref<1x384xf32, #tpu.memory_space<vmem>>, %arg5: memref<384x1152xbf16, #tpu.memory_space<vmem>>, %arg6: memref<1x1152xf32, #tpu.memory_space<vmem>>, %arg7: memref<1152x5xbf16, #tpu.memory_space<vmem>>, %arg8: memref<1x5xf32, #tpu.memory_space<vmem>>, %arg9: memref<1x5xf32, #tpu.memory_space<vmem>>, %arg10: memref<1x1152xf32, #tpu.memory_space<vmem>>) attributes {dimension_semantics = [#tpu.dimension_semantics<parallel>, #tpu.dimension_semantics<arbitrary>], iteration_bounds = array<i64: 1, 3>, scalar_prefetch = 0 : i64, scratch_operands = 1 : i64, tpu.core_type = #tpu.core_type<tc>, window_params = [{transform_indices = @transform_0, window_bounds = array<i64: 1, 128>}, {transform_indices = @transform_1, window_bounds = array<i64: 128, 384>}, {transform_indices = @transform_2, window_bounds = array<i64: 1, 384>}, {transform_indices = @transform_3, window_bounds = array<i64: 384, 1152>}, {pipeline_mode = #tpu.pipeline_mode<synchronous>, transform_indices = @transform_4, window_bounds = array<i64: 1, 1152>}, {pipeline_mode = #tpu.pipeline_mode<synchronous>, transform_indices = @transform_5, window_bounds = array<i64: 1152, 5>}, {pipeline_mode = #tpu.pipeline_mode<synchronous>, transform_indices = @transform_6, window_bounds = array<i64: 1, 5>}, {transform_indices = @transform_7, window_bounds = array<i64: 1, 5>}]} {
    %c0_i32 = arith.constant 0 : i32
    %0 = arith.cmpi eq, %arg1, %c0_i32 : i32
    %1 = arith.extui %0 : i1 to i32
    %c0_i32_0 = arith.constant 0 : i32
    %2 = arith.cmpi ne, %1, %c0_i32_0 : i32
    scf.if %2 {
      %cst_15 = arith.constant 0.000000e+00 : f32
      %20 = vector.broadcast %cst_15 : f32 to vector<1x1152xf32>
      %c0_16 = arith.constant 0 : index
      %c0_17 = arith.constant 0 : index
      %21 = vector.load %arg10[%c0_16, %c0_17] : memref<1x1152xf32, #tpu.memory_space<vmem>>, vector<1x1152xf32>
      tpu.vector_store %arg10[%c0_16, %c0_17], %20 {strides = array<i32>} : memref<1x1152xf32, #tpu.memory_space<vmem>>, vector<1x1152xf32>,
    } else {
    }
    %c0 = arith.constant 0 : index
    %c0_1 = arith.constant 0 : index
    %3 = vector.load %arg2[%c0, %c0_1] : memref<1x128xbf16, #tpu.memory_space<vmem>>, vector<1x128xbf16>
    %c0_2 = arith.constant 0 : index
    %c0_3 = arith.constant 0 : index
    %4 = vector.load %arg3[%c0_2, %c0_3] : memref<128x384xbf16, #tpu.memory_space<vmem>>, vector<128x384xbf16>
    %cst = arith.constant dense<0.000000e+00> : vector<1x384xf32>
    %5 = tpu.matmul %3, %4, %cst {dimension_numbers = #tpu.dot_dimension_numbers<[1], [0], [0], [1], [0, 0, 1, 1], [], []>} : vector<1x128xbf16>, vector<128x384xbf16>, vector<1x384xf32> -> vector<1x384xf32>
    %c0_4 = arith.constant 0 : index
    %c0_5 = arith.constant 0 : index
    %6 = vector.load %arg4[%c0_4, %c0_5] : memref<1x384xf32, #tpu.memory_space<vmem>>, vector<1x384xf32>
    %7 = arith.addf %5, %6 : vector<1x384xf32>
    %cst_6 = arith.constant 0.00999999977 : f32
    %8 = vector.broadcast %cst_6 : f32 to vector<1x384xf32>
    %9 = arith.mulf %7, %8 : vector<1x384xf32>
    %10 = arith.maximumf %7, %9 : vector<1x384xf32>
    %c0_7 = arith.constant 0 : index
    %c0_8 = arith.constant 0 : index
    %11 = vector.load %arg10[%c0_7, %c0_8] : memref<1x1152xf32, #tpu.memory_space<vmem>>, vector<1x1152xf32>
    %12 = arith.truncf %10 : vector<1x384xf32> to vector<1x384xbf16>
    %c0_9 = arith.constant 0 : index
    %c0_10 = arith.constant 0 : index
    %13 = vector.load %arg5[%c0_9, %c0_10] : memref<384x1152xbf16, #tpu.memory_space<vmem>>, vector<384x1152xbf16>
    %cst_11 = arith.constant dense<0.000000e+00> : vector<1x1152xf32>
    %14 = tpu.matmul %12, %13, %cst_11 {dimension_numbers = #tpu.dot_dimension_numbers<[1], [0], [0], [1], [0, 0, 1, 1], [], []>} : vector<1x384xbf16>, vector<384x1152xbf16>, vector<1x1152xf32> -> vector<1x1152xf32>
    %15 = arith.addf %11, %14 : vector<1x1152xf32>
    %c0_12 = arith.constant 0 : index
    %c0_13 = arith.constant 0 : index
    %16 = vector.load %arg10[%c0_12, %c0_13] : memref<1x1152xf32, #tpu.memory_space<vmem>>, vector<1x1152xf32>
    tpu.vector_store %arg10[%c0_12, %c0_13], %15 {strides = array<i32>} : memref<1x1152xf32, #tpu.memory_space<vmem>>, vector<1x1152xf32>,
    %c2_i32 = arith.constant 2 : i32
    %17 = arith.cmpi eq, %arg1, %c2_i32 : i32
    %18 = arith.extui %17 : i1 to i32
    %c0_i32_14 = arith.constant 0 : i32
    %19 = arith.cmpi ne, %18, %c0_i32_14 : i32
    scf.if %19 {
      %c0_15 = arith.constant 0 : index
      %c0_16 = arith.constant 0 : index
      %20 = vector.load %arg10[%c0_15, %c0_16] : memref<1x1152xf32, #tpu.memory_space<vmem>>, vector<1x1152xf32>
      %c0_17 = arith.constant 0 : index
      %c0_18 = arith.constant 0 : index
      %21 = vector.load %arg6[%c0_17, %c0_18] : memref<1x1152xf32, #tpu.memory_space<vmem>>, vector<1x1152xf32>
      %22 = arith.addf %20, %21 : vector<1x1152xf32>
      %cst_19 = arith.constant 0.00999999977 : f32
      %23 = vector.broadcast %cst_19 : f32 to vector<1x1152xf32>
      %24 = arith.mulf %22, %23 : vector<1x1152xf32>
      %25 = arith.maximumf %22, %24 : vector<1x1152xf32>
      %26 = arith.truncf %25 : vector<1x1152xf32> to vector<1x1152xbf16>
      %c0_20 = arith.constant 0 : index
      %c0_21 = arith.constant 0 : index
      %27 = vector.load %arg7[%c0_20, %c0_21] : memref<1152x5xbf16, #tpu.memory_space<vmem>>, vector<1152x5xbf16>
      %cst_22 = arith.constant dense<0.000000e+00> : vector<1x5xf32>
      %28 = tpu.matmul %26, %27, %cst_22 {dimension_numbers = #tpu.dot_dimension_numbers<[1], [0], [0], [1], [0, 0, 1, 1], [], []>} : vector<1x1152xbf16>, vector<1152x5xbf16>, vector<1x5xf32> -> vector<1x5xf32>
      %c0_23 = arith.constant 0 : index
      %c0_24 = arith.constant 0 : index
      %29 = vector.load %arg8[%c0_23, %c0_24] : memref<1x5xf32, #tpu.memory_space<vmem>>, vector<1x5xf32>
      %30 = arith.addf %28, %29 : vector<1x5xf32>
      %c0_25 = arith.constant 0 : index
      %c0_26 = arith.constant 0 : index
      %31 = vector.load %arg9[%c0_25, %c0_26] : memref<1x5xf32, #tpu.memory_space<vmem>>, vector<1x5xf32>
      tpu.vector_store %arg9[%c0_25, %c0_26], %30 {strides = array<i32>} : memref<1x5xf32, #tpu.memory_space<vmem>>, vector<1x5xf32>,
    } else {
    }
    return
  }
  func.func @transform_0(%arg0: i32, %arg1: i32) -> (i32, i32) {
    %c0_i32 = arith.constant 0 : i32
    %c0_i32_0 = arith.constant 0 : i32
    return %arg0, %c0_i32 : i32, i32
  }
  func.func @transform_1(%arg0: i32, %arg1: i32) -> (i32, i32) {
    %c0_i32 = arith.constant 0 : i32
    %c0_i32_0 = arith.constant 0 : i32
    return %c0_i32, %arg1 : i32, i32
  }
  func.func @transform_2(%arg0: i32, %arg1: i32) -> (i32, i32) {
    %c0_i32 = arith.constant 0 : i32
    %c0_i32_0 = arith.constant 0 : i32
    return %c0_i32, %arg1 : i32, i32
  }
  func.func @transform_3(%arg0: i32, %arg1: i32) -> (i32, i32) {
    %c0_i32 = arith.constant 0 : i32
    %c0_i32_0 = arith.constant 0 : i32
    return %arg1, %c0_i32 : i32, i32
  }
  func.func @transform_4(%arg0: i32, %arg1: i32) -> (i32, i32) {
    %c0_i32 = arith.constant 0 : i32
    %c0_i32_0 = arith.constant 0 : i32
    %c0_i32_1 = arith.constant 0 : i32
    return %c0_i32, %c0_i32_0 : i32, i32
  }
  func.func @transform_5(%arg0: i32, %arg1: i32) -> (i32, i32) {
    %c0_i32 = arith.constant 0 : i32
    %c0_i32_0 = arith.constant 0 : i32
    %c0_i32_1 = arith.constant 0 : i32
    return %c0_i32, %c0_i32_0 : i32, i32
  }
  func.func @transform_6(%arg0: i32, %arg1: i32) -> (i32, i32) {
    %c0_i32 = arith.constant 0 : i32
    %c0_i32_0 = arith.constant 0 : i32
    %c0_i32_1 = arith.constant 0 : i32
    return %c0_i32, %c0_i32_0 : i32, i32
  }
  func.func @transform_7(%arg0: i32, %arg1: i32) -> (i32, i32) {
    %c0_i32 = arith.constant 0 : i32
    %c0_i32_0 = arith.constant 0 : i32
    return %arg0, %c0_i32 : i32, i32
  }
}

</mosaic_0001>

<llo_original>
// kernel: tpu_custom_call.1
$region0: #{tpu_custom_call.1}
  #allocation0 [shape = 'u32[]', space=smem, size = 0x4, offset = 0x4, fixed_abs, tag = 'smem constant byte address 0x4 - core index']
  #allocation1 [shape = 'u32[72,128]{1,0:T(1,128)}', space=vmem, size = 0x9000, scoped, tag = 'internal scratch']
  #allocation2 [shape = 'f32[1,1152]{1,0:T(1,128)}', space=vmem, size = 0x1200, scoped, tag = 'scratch operand']
  %s0 = inlined_call_operand.hbm [shape: bf16[1,128], index: 0, kind: input, shape index: {}]
  %s1 = inlined_call_operand.hbm [shape: bf16[128,1152], index: 1, kind: input, shape index: {}]
  %s2 = inlined_call_operand.hbm [shape: f32[1,1152], index: 2, kind: input, shape index: {}]
  %s3 = inlined_call_operand.hbm [shape: bf16[1152,1152], index: 3, kind: input, shape index: {}]
  %s4 = inlined_call_operand.hbm [shape: f32[1,1152], index: 4, kind: input, shape index: {}]
  %s5 = inlined_call_operand.vmem [shape: bf16[1152,5], index: 5, kind: input, shape index: {}]
  %s6 = inlined_call_operand.hbm [shape: f32[1,5], index: 6, kind: input, shape index: {}]
  %s7 = inlined_call_operand.hbm [shape: f32[1,5], index: 7, kind: output, shape index: {}]
  %s8 = sld [smem:[#allocation0]]
  $region93: #{tpu_custom_call.1} parent=0
    _
  %s10 = ssub.s32 1, %s8
  %s11 = scalar_select 0, %s10, %s8
  $region1: #{tpu_custom_call.1} parent=0
    #allocation3 [shape = 'u8[512]{0}', space=vmem, size = 0x400, scoped, tag = 'input window, operand 0, single buffered']
    #allocation4 [shape = 's32[2]{0}', space=sflag, size = 0x8, scoped, tag = 'scoped memory for tpu_custom_call.1']
    #allocation5 [shape = 's32[2]{0}', space=sflag, size = 0x8, scoped, tag = 'scoped memory for tpu_custom_call.1']
    #allocation6 [shape = 'u8[196608]{0}', space=vmem, size = 0x30000, scoped, tag = 'input window, operand 1']
    #allocation7 [shape = 's32[2]{0}', space=sflag, size = 0x8, scoped, tag = 'scoped memory for tpu_custom_call.1']
    #allocation8 [shape = 'u8[3072]{0}', space=vmem, size = 0xc00, scoped, tag = 'input window, operand 2']
    #allocation9 [shape = 'u8[1769472]{0}', space=vmem, size = 0x1b0000, scoped, tag = 'input window, operand 3']
    #allocation10 [shape = 's32[2]{0}', space=sflag, size = 0x8, scoped, tag = 'scoped memory for tpu_custom_call.1']
    #allocation11 [shape = 'u8[4608]{0}', space=vmem, size = 0x1400, scoped, tag = 'input window, operand 4, single buffered']
    #allocation12 [shape = 'u8[512]{0}', space=vmem, size = 0x400, scoped, tag = 'input window, operand 6, single buffered']
    #allocation13 [shape = 's32[1]{0}', space=sflag, size = 0x4, scoped, tag = 'scoped memory for tpu_custom_call.1']
    #allocation14 [shape = 'u8[512]{0}', space=vmem, size = 0x400, scoped, tag = 'output window, operand 0, single buffered']
    %12 = vsyncpa [#allocation4], 0
    %13 = vsyncpa [#allocation7], 0
    %s14 = scalar_lea.sflag [#allocation7], 1
    %15 = vsyncpa %s14, 0
    %16 = vsyncpa [#allocation10], 0
    %s17 = scalar_lea.sflag [#allocation10], 1
    %18 = vsyncpa %s17, 0
    %19 = vsyncpa [#allocation13], 0
    %20 = vsyncpa [#allocation5], 0
    loop: start=0, step=1, limit=5
    $region2: #{tpu_custom_call.1} parent=1 // loop_pre_header
      _
    $region3: #{tpu_custom_call.1} parent=1 // loop_header
      %s22 = sphi 0, %s26
      %p23 = scmp.ge.s32.totalorder %s22, 5
      %s29 = sphi 0, %s41
      %s30 = sphi 0, %s37
      %s31 = sphi 0, %s29
      %s32 = sphi 0, %s30
      %s33 = sphi 0, %s31
      %s34 = sphi 0, %s32
      %s44 = sphi 0, %s46
      %s47 = sphi 0, %s44
      %s48 = sphi 0, %s47
      %s64 = sphi 0, %s48
      %s70 = sphi 0, %s72
      %s73 = sphi 0, %s70
      %s74 = sphi 0, %s73
      %s90 = sphi 0, %s74
      %s96 = sphi 0, %s98
      %s99 = sphi 0, %s96
      %s100 = sphi 0, %s99
      %s116 = sphi 0, %s100
      %s122 = sphi 0, %s124
      %s125 = sphi 0, %s122
      %s126 = sphi 0, %s125
      %s142 = sphi 0, %s126
      %s146 = sphi 0, %s146
      %s148 = sphi 0, %s146
      %s149 = sphi 0, %s148
      %s163 = sphi 0, %s149
      %s167 = sphi 0, %s167
      %s169 = sphi 0, %s167
      %s170 = sphi 0, %s169
      %s184 = sphi 0, %s170
      %s188 = sphi 0, %s188
      %s190 = sphi 0, %s188
      %s191 = sphi 0, %s190
      %s205 = sphi 0, %s191
      %s211 = sphi 0, %s213
      %s214 = sphi 0, %s211
      %s215 = sphi 0, %s214
      %s231 = sphi 0, %s215
    $region4: #{tpu_custom_call.1} parent=1 // loop_header_branch
      %25 = sbr.rel (%p23) target = $region8
    $region5: #{tpu_custom_call.1} parent=1 // loop_body
      %s27 = ssub.s32 %s22, 1
      %s28 = ssub.s32 %s22, 2
      %s35 = sadd.s32 1, %s30
      %p36 = scmp.ge.s32.totalorder %s35, 3
      %s37 = scalar_select %p36, 0, %s35
      %s38 = sadd.s32 1, %s29
      %s39 = scalar_select %p36, %s38, %s29
      %p40 = scmp.ge.s32.totalorder %s39, 1
      %s41 = scalar_select %p40, 0, %s39
      %s42 = ssub.s32 %s29, %s41
      %p43 = scmp.eq.s32.totalorder %s42, 0
      %s45 = sadd.s32 %s44, 1
      %s46 = scalar_select %p43, %s44, %s45
      %p49 = pneg %p43
      %p50 = scmp.eq.s32.totalorder %s22, 2
      %p51 = por %p49, %p50
      %p52 = scmp.ne.s32.totalorder %s44, %s47
      %p53 = scmp.eq.s32.totalorder %s22, 0
      %p54 = por %p52, %p53
      %p55 = scmp.ne.s32.totalorder %s44, %s47
      %p56 = scmp.eq.s32.totalorder %s27, 2
      %p57 = por %p55, %p56
      %p58 = scmp.ne.s32.totalorder %s47, %s48
      %p59 = scmp.eq.s32.totalorder %s27, 0
      %p60 = por %p58, %p59
      %p61 = scmp.ne.s32.totalorder %s47, %s48
      %p62 = scmp.eq.s32.totalorder %s28, 2
      %p63 = por %p61, %p62
      %p65 = scmp.ne.s32.totalorder %s48, %s64
      %p66 = scmp.eq.s32.totalorder %s28, 0
      %p67 = por %p65, %p66
      %s68 = ssub.s32 %s30, %s37
      %p69 = scmp.eq.s32.totalorder %s68, 0
      %s71 = sadd.s32 %s70, 1
      %s72 = scalar_select %p69, %s70, %s71
      %p75 = pneg %p69
      %p76 = scmp.eq.s32.totalorder %s22, 2
      %p77 = por %p75, %p76
      %p78 = scmp.ne.s32.totalorder %s70, %s73
      %p79 = scmp.eq.s32.totalorder %s22, 0
      %p80 = por %p78, %p79
      %p81 = scmp.ne.s32.totalorder %s70, %s73
      %p82 = scmp.eq.s32.totalorder %s27, 2
      %p83 = por %p81, %p82
      %p84 = scmp.ne.s32.totalorder %s73, %s74
      %p85 = scmp.eq.s32.totalorder %s27, 0
      %p86 = por %p84, %p85
      %p87 = scmp.ne.s32.totalorder %s73, %s74
      %p88 = scmp.eq.s32.totalorder %s28, 2
      %p89 = por %p87, %p88
      %p91 = scmp.ne.s32.totalorder %s74, %s90
      %p92 = scmp.eq.s32.totalorder %s28, 0
      %p93 = por %p91, %p92
      %s94 = ssub.s32 %s30, %s37
      %p95 = scmp.eq.s32.totalorder %s94, 0
      %s97 = sadd.s32 %s96, 1
      %s98 = scalar_select %p95, %s96, %s97
      %p101 = pneg %p95
      %p102 = scmp.eq.s32.totalorder %s22, 2
      %p103 = por %p101, %p102
      %p104 = scmp.ne.s32.totalorder %s96, %s99
      %p105 = scmp.eq.s32.totalorder %s22, 0
      %p106 = por %p104, %p105
      %p107 = scmp.ne.s32.totalorder %s96, %s99
      %p108 = scmp.eq.s32.totalorder %s27, 2
      %p109 = por %p107, %p108
      %p110 = scmp.ne.s32.totalorder %s99, %s100
      %p111 = scmp.eq.s32.totalorder %s27, 0
      %p112 = por %p110, %p111
      %p113 = scmp.ne.s32.totalorder %s99, %s100
      %p114 = scmp.eq.s32.totalorder %s28, 2
      %p115 = por %p113, %p114
      %p117 = scmp.ne.s32.totalorder %s100, %s116
      %p118 = scmp.eq.s32.totalorder %s28, 0
      %p119 = por %p117, %p118
      %s120 = ssub.s32 %s30, %s37
      %p121 = scmp.eq.s32.totalorder %s120, 0
      %s123 = sadd.s32 %s122, 1
      %s124 = scalar_select %p121, %s122, %s123
      %p127 = pneg %p121
      %p128 = scmp.eq.s32.totalorder %s22, 2
      %p129 = por %p127, %p128
      %p130 = scmp.ne.s32.totalorder %s122, %s125
      %p131 = scmp.eq.s32.totalorder %s22, 0
      %p132 = por %p130, %p131
      %p133 = scmp.ne.s32.totalorder %s122, %s125
      %p134 = scmp.eq.s32.totalorder %s27, 2
      %p135 = por %p133, %p134
      %p136 = scmp.ne.s32.totalorder %s125, %s126
      %p137 = scmp.eq.s32.totalorder %s27, 0
      %p138 = por %p136, %p137
      %p139 = scmp.ne.s32.totalorder %s125, %s126
      %p140 = scmp.eq.s32.totalorder %s28, 2
      %p141 = por %p139, %p140
      %p143 = scmp.ne.s32.totalorder %s126, %s142
      %p144 = scmp.eq.s32.totalorder %s28, 0
      %p145 = por %p143, %p144
      %s147 = sadd.s32 %s146, 1
      %p150 = scmp.eq.s32.totalorder %s22, 2
      %p151 = scmp.ne.s32.totalorder %s146, %s148
      %p152 = scmp.eq.s32.totalorder %s22, 0
      %p153 = por %p151, %p152
      %p154 = scmp.ne.s32.totalorder %s146, %s148
      %p155 = scmp.eq.s32.totalorder %s27, 2
      %p156 = por %p154, %p155
      %p157 = scmp.ne.s32.totalorder %s148, %s149
      %p158 = scmp.eq.s32.totalorder %s27, 0
      %p159 = por %p157, %p158
      %p160 = scmp.ne.s32.totalorder %s148, %s149
      %p161 = scmp.eq.s32.totalorder %s28, 2
      %p162 = por %p160, %p161
      %p164 = scmp.ne.s32.totalorder %s149, %s163
      %p165 = scmp.eq.s32.totalorder %s28, 0
      %p166 = por %p164, %p165
      %s168 = sadd.s32 %s167, 1
      %p171 = scmp.eq.s32.totalorder %s22, 2
      %p172 = scmp.ne.s32.totalorder %s167, %s169
      %p173 = scmp.eq.s32.totalorder %s22, 0
      %p174 = por %p172, %p173
      %p175 = scmp.ne.s32.totalorder %s167, %s169
      %p176 = scmp.eq.s32.totalorder %s27, 2
      %p177 = por %p175, %p176
      %p178 = scmp.ne.s32.totalorder %s169, %s170
      %p179 = scmp.eq.s32.totalorder %s27, 0
      %p180 = por %p178, %p179
      %p181 = scmp.ne.s32.totalorder %s169, %s170
      %p182 = scmp.eq.s32.totalorder %s28, 2
      %p183 = por %p181, %p182
      %p185 = scmp.ne.s32.totalorder %s170, %s184
      %p186 = scmp.eq.s32.totalorder %s28, 0
      %p187 = por %p185, %p186
      %s189 = sadd.s32 %s188, 1
      %p192 = scmp.eq.s32.totalorder %s22, 2
      %p193 = scmp.ne.s32.totalorder %s188, %s190
      %p194 = scmp.eq.s32.totalorder %s22, 0
      %p195 = por %p193, %p194
      %p196 = scmp.ne.s32.totalorder %s188, %s190
      %p197 = scmp.eq.s32.totalorder %s27, 2
      %p198 = por %p196, %p197
      %p199 = scmp.ne.s32.totalorder %s190, %s191
      %p200 = scmp.eq.s32.totalorder %s27, 0
      %p201 = por %p199, %p200
      %p202 = scmp.ne.s32.totalorder %s190, %s191
      %p203 = scmp.eq.s32.totalorder %s28, 2
      %p204 = por %p202, %p203
      %p206 = scmp.ne.s32.totalorder %s191, %s205
      %p207 = scmp.eq.s32.totalorder %s28, 0
      %p208 = por %p206, %p207
      %s209 = ssub.s32 %s29, %s41
      %p210 = scmp.eq.s32.totalorder %s209, 0
      %s212 = sadd.s32 %s211, 1
      %s213 = scalar_select %p210, %s211, %s212
      %p216 = pneg %p210
      %p217 = scmp.eq.s32.totalorder %s22, 2
      %p218 = por %p216, %p217
      %p219 = scmp.ne.s32.totalorder %s211, %s214
      %p220 = scmp.eq.s32.totalorder %s22, 0
      %p221 = por %p219, %p220
      %p222 = scmp.ne.s32.totalorder %s211, %s214
      %p223 = scmp.eq.s32.totalorder %s27, 2
      %p224 = por %p222, %p223
      %p225 = scmp.ne.s32.totalorder %s214, %s215
      %p226 = scmp.eq.s32.totalorder %s27, 0
      %p227 = por %p225, %p226
      %p228 = scmp.ne.s32.totalorder %s214, %s215
      %p229 = scmp.eq.s32.totalorder %s28, 2
      %p230 = por %p228, %p229
      %p232 = scmp.ne.s32.totalorder %s215, %s231
      %p233 = scmp.eq.s32.totalorder %s28, 0
      %p234 = por %p232, %p233
      %p235 = scmp.le.s32.totalorder 1, %s22
      %p236 = scmp.lt.s32.totalorder %s22, 4
      %p237 = pnand %p235, %p236
      %p238 = pneg %p237
      // Predicated region
      $region9: #{tpu_custom_call.1} parent=5 // pred_check
        _
      $region10: #{tpu_custom_call.1} parent=5 // pred_check_branch
        %240 = sbr.rel (%p237) target = $region12
      $region11: #{tpu_custom_call.1} parent=5 // pred_region
        %s241 = ssub.s32 %s22, 1
        // Predicated region
        $region13: #{tpu_custom_call.1} parent=11 // pred_check
          %p242 = pneg %p60
        $region14: #{tpu_custom_call.1} parent=11 // pred_check_branch
          %244 = sbr.rel (%p242) target = $region16
        $region15: #{tpu_custom_call.1} parent=11 // pred_region
          %246 = vsyncadd [#allocation4], 0
          %s247 = scalar_lea.hbm %s0, %s31
          %s249 = sshll.u32 %s247, 4
          %s250 = int_to_ptr.hbm [resolvable:$true] %s249
          %s251 = sshll.u32 [#allocation3], 4
          %s252 = int_to_ptr.vmem [resolvable:$true] %s251
          %254 = dma.hbm_to_vmem [thread:$0]  %s250, 16, %s252, [#allocation4]
        $region16: #{tpu_custom_call.1} parent=11 // pred_fallthru
          _
        // Predicated region
        $region17: #{tpu_custom_call.1} parent=11 // pred_check
          %p255 = pneg %p159
        $region18: #{tpu_custom_call.1} parent=11 // pred_check_branch
          %257 = sbr.rel (%p255) target = $region20
        $region19: #{tpu_custom_call.1} parent=11 // pred_region
          %259 = vsyncadd [#allocation10], 0
          %s261 = sshll.u32 %s4, 4
          %s262 = int_to_ptr.hbm [resolvable:$true] %s261
          %s263 = sshll.u32 [#allocation11], 4
          %s264 = int_to_ptr.vmem [resolvable:$true] %s263
          %266 = dma.hbm_to_vmem [thread:$0]  %s262, 144, %s264, [#allocation10]
        $region20: #{tpu_custom_call.1} parent=11 // pred_fallthru
          _
        // Predicated region
        $region21: #{tpu_custom_call.1} parent=11 // pred_check
          %p267 = pneg %p180
        $region22: #{tpu_custom_call.1} parent=11 // pred_check_branch
          %269 = sbr.rel (%p267) target = $region24
        $region23: #{tpu_custom_call.1} parent=11 // pred_region
          _
        $region24: #{tpu_custom_call.1} parent=11 // pred_fallthru
          _
        // Predicated region
        $region25: #{tpu_custom_call.1} parent=11 // pred_check
          %p270 = pneg %p201
        $region26: #{tpu_custom_call.1} parent=11 // pred_check_branch
          %272 = sbr.rel (%p270) target = $region28
        $region27: #{tpu_custom_call.1} parent=11 // pred_region
          %274 = vsyncadd [#allocation13], 0
          %s276 = sshll.u32 %s6, 4
          %s277 = int_to_ptr.hbm [resolvable:$true] %s276
          %s278 = sshll.u32 [#allocation12], 4
          %s279 = int_to_ptr.vmem [resolvable:$true] %s278
          %281 = dma.hbm_to_vmem [thread:$0]  %s277, 16, %s279, [#allocation13]
        $region28: #{tpu_custom_call.1} parent=11 // pred_fallthru
          _
      $region12: #{tpu_custom_call.1} parent=5 // pred_fallthru
        _
      %p282 = scmp.lt.s32.totalorder %s22, 3
      // Predicated region
      $region29: #{tpu_custom_call.1} parent=5 // pred_check
        %p283 = pneg %p282
      $region30: #{tpu_custom_call.1} parent=5 // pred_check_branch
        %285 = sbr.rel (%p283) target = $region32
      $region31: #{tpu_custom_call.1} parent=5 // pred_region
        // Predicated region
        $region33: #{tpu_custom_call.1} parent=31 // pred_check
          %p286 = pneg %p80
        $region34: #{tpu_custom_call.1} parent=31 // pred_check_branch
          %288 = sbr.rel (%p286) target = $region36
        $region35: #{tpu_custom_call.1} parent=31 // pred_region
          %s289 = sand.u32 %s22, 1
          %s290 = scalar_lea.sflag [#allocation7], %s289
          %s291 = sand.u32 %s70, 1
          %s292 = smul.addr %s291, 192
          %s293 = scalar_lea.vmem [#allocation6], %s292
          %s294 = smul.u32 3, %s30
          %296 = vsyncadd %s290, 0
          %s297 = smul.addr %s294, 4
          %s298 = scalar_lea.hbm %s1, %s297
          %s299 = sshll.u32 %s298, 4
          %s300 = int_to_ptr.hbm [resolvable:$true] %s299
          %s301 = sshll.u32 %s293, 4
          %s302 = int_to_ptr.vmem [resolvable:$true] %s301
          %307 = dma.hbm_to_vmem [thread:$0]  %s300, 3072, %s302, %s290, 576, 192, 12
        $region36: #{tpu_custom_call.1} parent=31 // pred_fallthru
          _
        // Predicated region
        $region37: #{tpu_custom_call.1} parent=31 // pred_check
          %p308 = pneg %p106
        $region38: #{tpu_custom_call.1} parent=31 // pred_check_branch
          %310 = sbr.rel (%p308) target = $region40
        $region39: #{tpu_custom_call.1} parent=31 // pred_region
          %s311 = sand.u32 %s22, 1
          %s312 = scalar_lea.sflag [#allocation7], %s311
          %s313 = sand.u32 %s96, 1
          %s314 = smul.addr %s313, 3
          %s315 = scalar_lea.vmem [#allocation8], %s314
          %s316 = smul.u32 3, %s30
          %318 = vsyncadd %s312, 0
          %s319 = scalar_lea.hbm %s2, %s316
          %s321 = sshll.u32 %s319, 4
          %s322 = int_to_ptr.hbm [resolvable:$true] %s321
          %s323 = sshll.u32 %s315, 4
          %s324 = int_to_ptr.vmem [resolvable:$true] %s323
          %326 = dma.hbm_to_vmem [thread:$0]  %s322, 48, %s324, %s312
        $region40: #{tpu_custom_call.1} parent=31 // pred_fallthru
          _
        // Predicated region
        $region41: #{tpu_custom_call.1} parent=31 // pred_check
          %p327 = pneg %p132
        $region42: #{tpu_custom_call.1} parent=31 // pred_check_branch
          %329 = sbr.rel (%p327) target = $region44
        $region43: #{tpu_custom_call.1} parent=31 // pred_region
          %s330 = sand.u32 %s22, 1
          %s331 = scalar_lea.sflag [#allocation10], %s330
          %s332 = sand.u32 %s122, 1
          %s333 = smul.addr %s332, 1728
          %s334 = scalar_lea.vmem [#allocation9], %s333
          %s335 = smul.u32 48, %s30
          %337 = vsyncadd %s331, 0
          %s338 = smul.addr %s335, 9
          %s339 = smul.addr %s338, 4
          %s340 = scalar_lea.hbm %s3, %s339
          %s341 = sshll.u32 %s340, 4
          %s342 = int_to_ptr.hbm [resolvable:$true] %s341
          %s343 = sshll.u32 %s334, 4
          %s344 = int_to_ptr.vmem [resolvable:$true] %s343
          %349 = dma.hbm_to_vmem [thread:$0]  %s342, 27648, %s344, %s331, 576, 576, 36
        $region44: #{tpu_custom_call.1} parent=31 // pred_fallthru
          _
      $region32: #{tpu_custom_call.1} parent=5 // pred_fallthru
        _
      %p350 = scmp.le.s32.totalorder 1, %s22
      %p351 = scmp.lt.s32.totalorder %s22, 4
      %p352 = pnand %p350, %p351
      %p353 = pneg %p352
      // Predicated region
      $region45: #{tpu_custom_call.1} parent=5 // pred_check
        _
      $region46: #{tpu_custom_call.1} parent=5 // pred_check_branch
        %355 = sbr.rel (%p352) target = $region48
      $region47: #{tpu_custom_call.1} parent=5 // pred_region
        %s356 = ssub.s32 %s22, 1
        // Predicated region
        $region49: #{tpu_custom_call.1} parent=47 // pred_check
          %p357 = pneg %p60
        $region50: #{tpu_custom_call.1} parent=47 // pred_check_branch
          %359 = sbr.rel (%p357) target = $region52
        $region51: #{tpu_custom_call.1} parent=47 // pred_region
          %361 = dma.done [#allocation4], 16
        $region52: #{tpu_custom_call.1} parent=47 // pred_fallthru
          _
        %s362 = sand.u32 %s27, 1
        %s363 = scalar_lea.sflag [#allocation7], %s362
        %s364 = sand.u32 %s73, 1
        %s365 = smul.addr %s364, 192
        %s366 = scalar_lea.vmem [#allocation6], %s365
        // Predicated region
        $region53: #{tpu_custom_call.1} parent=47 // pred_check
          %p367 = pneg %p86
        $region54: #{tpu_custom_call.1} parent=47 // pred_check_branch
          %369 = sbr.rel (%p367) target = $region56
        $region55: #{tpu_custom_call.1} parent=47 // pred_region
          %371 = dma.done %s363, 3072
        $region56: #{tpu_custom_call.1} parent=47 // pred_fallthru
          _
        %s372 = sand.u32 %s27, 1
        %s373 = scalar_lea.sflag [#allocation7], %s372
        %s374 = sand.u32 %s99, 1
        %s375 = smul.addr %s374, 3
        %s376 = scalar_lea.vmem [#allocation8], %s375
        // Predicated region
        $region57: #{tpu_custom_call.1} parent=47 // pred_check
          %p377 = pneg %p112
        $region58: #{tpu_custom_call.1} parent=47 // pred_check_branch
          %379 = sbr.rel (%p377) target = $region60
        $region59: #{tpu_custom_call.1} parent=47 // pred_region
          %381 = dma.done %s373, 48
        $region60: #{tpu_custom_call.1} parent=47 // pred_fallthru
          _
        %s382 = sand.u32 %s27, 1
        %s383 = scalar_lea.sflag [#allocation10], %s382
        %s384 = sand.u32 %s125, 1
        %s385 = smul.addr %s384, 1728
        %s386 = scalar_lea.vmem [#allocation9], %s385
        // Predicated region
        $region61: #{tpu_custom_call.1} parent=47 // pred_check
          %p387 = pneg %p138
        $region62: #{tpu_custom_call.1} parent=47 // pred_check_branch
          %389 = sbr.rel (%p387) target = $region64
        $region63: #{tpu_custom_call.1} parent=47 // pred_region
          %391 = dma.done %s383, 27648
        $region64: #{tpu_custom_call.1} parent=47 // pred_fallthru
          _
        // Predicated region
        $region65: #{tpu_custom_call.1} parent=47 // pred_check
          %p392 = pneg %p159
        $region66: #{tpu_custom_call.1} parent=47 // pred_check_branch
          %394 = sbr.rel (%p392) target = $region68
        $region67: #{tpu_custom_call.1} parent=47 // pred_region
          %396 = dma.done [#allocation10], 144
        $region68: #{tpu_custom_call.1} parent=47 // pred_fallthru
          _
        // Predicated region
        $region69: #{tpu_custom_call.1} parent=47 // pred_check
          %p397 = pneg %p201
        $region70: #{tpu_custom_call.1} parent=47 // pred_check_branch
          %399 = sbr.rel (%p397) target = $region72
        $region71: #{tpu_custom_call.1} parent=47 // pred_region
          %401 = dma.done [#allocation13], 16
        $region72: #{tpu_custom_call.1} parent=47 // pred_fallthru
          _
        %p402 = pneg %p60
        %p403 = pneg %p57
        %s404 = sand.u32 %s27, 1
        %s405 = scalar_lea.sflag [#allocation7], %s404
        %s406 = sand.u32 %s73, 1
        %s407 = smul.addr %s406, 192
        %s408 = scalar_lea.vmem [#allocation6], %s407
        %p409 = pneg %p86
        %p410 = pneg %p83
        %s411 = sand.u32 %s27, 1
        %s412 = scalar_lea.sflag [#allocation7], %s411
        %s413 = sand.u32 %s99, 1
        %s414 = smul.addr %s413, 3
        %s415 = scalar_lea.vmem [#allocation8], %s414
        %p416 = pneg %p112
        %p417 = pneg %p109
        %s418 = sand.u32 %s27, 1
        %s419 = scalar_lea.sflag [#allocation10], %s418
        %s420 = sand.u32 %s125, 1
        %s421 = smul.addr %s420, 1728
        %s422 = scalar_lea.vmem [#allocation9], %s421
        %p423 = pneg %p138
        %p424 = pneg %p135
        %p425 = pneg %p159
        %p426 = pneg %p156
        %p427 = pneg %p180
        %p428 = pneg %p177
        %p429 = pneg %p201
        %p430 = pneg %p198
        %p431 = pneg %p227
        %p432 = pneg %p224
        %s433 = smul.u32 3, %s32
        %s434 = smul.u32 3, %s32
        %s435 = smul.u32 48, %s32
        %p436 = scmp.eq.s32.totalorder %s32, 0
        // Predicated region
        $region73: #{tpu_custom_call.1} parent=47 // pred_check
          %p437 = pneg %p436
        $region74: #{tpu_custom_call.1} parent=47 // pred_check_branch
          %439 = sbr.rel (%p437) target = $region76
        $region75: #{tpu_custom_call.1} parent=47 // pred_region
          %440 = vst [vmem:[#allocation2] sm:$0xff] 0.0
          %v441 = vlaneseq
          %vm442 = vcmp.ge.s32.totalorder %v441, 0
          %vm443 = vcmp.lt.s32.totalorder %v441, 128
          %vm444 = vmand %vm442, %vm443
          %445 = vst.msk [vmem:[#allocation2 + $0x8] sm:$0x1] %vm444, 0.0
        $region76: #{tpu_custom_call.1} parent=47 // pred_fallthru
          _
        %v446 = vld [vmem:[#allocation3] sm:$0x1]
        %v447 = vld [vmem:[%s366] sm:$0xff]
        %v448 = vld [vmem:[%s366 + $0x8] sm:$0xf]
        %v449 = vld [vmem:[%s366 + $0xc] sm:$0xff]
        %v450 = vld [vmem:[%s366 + $0x14] sm:$0xf]
        %v451 = vld [vmem:[%s366 + $0x18] sm:$0xff]
        %v452 = vld [vmem:[%s366 + $0x20] sm:$0xf]
        %v453 = vld [vmem:[%s366 + $0x24] sm:$0xff]
        %v454 = vld [vmem:[%s366 + $0x2c] sm:$0xf]
        %v455 = vld [vmem:[%s366 + $0x30] sm:$0xff]
        %v456 = vld [vmem:[%s366 + $0x38] sm:$0xf]
        %v457 = vld [vmem:[%s366 + $0x3c] sm:$0xff]
        %v458 = vld [vmem:[%s366 + $0x44] sm:$0xf]
        %v459 = vld [vmem:[%s366 + $0x48] sm:$0xff]
        %v460 = vld [vmem:[%s366 + $0x50] sm:$0xf]
        %v461 = vld [vmem:[%s366 + $0x54] sm:$0xff]
        %v462 = vld [vmem:[%s366 + $0x5c] sm:$0xf]
        %v463 = vld [vmem:[%s366 + $0x60] sm:$0xff]
        %v464 = vld [vmem:[%s366 + $0x68] sm:$0xf]
        %v465 = vld [vmem:[%s366 + $0x6c] sm:$0xff]
        %v466 = vld [vmem:[%s366 + $0x74] sm:$0xf]
        %v467 = vld [vmem:[%s366 + $0x78] sm:$0xff]
        %v468 = vld [vmem:[%s366 + $0x80] sm:$0xf]
        %v469 = vld [vmem:[%s366 + $0x84] sm:$0xff]
        %v470 = vld [vmem:[%s366 + $0x8c] sm:$0xf]
        %v471 = vld [vmem:[%s366 + $0x90] sm:$0xff]
        %v472 = vld [vmem:[%s366 + $0x98] sm:$0xf]
        %v473 = vld [vmem:[%s366 + $0x9c] sm:$0xff]
        %v474 = vld [vmem:[%s366 + $0xa4] sm:$0xf]
        %v475 = vld [vmem:[%s366 + $0xa8] sm:$0xff]
        %v476 = vld [vmem:[%s366 + $0xb0] sm:$0xf]
        %v477 = vld [vmem:[%s366 + $0xb4] sm:$0xff]
        %v478 = vld [vmem:[%s366 + $0xbc] sm:$0xf]
        %v479 = vld [vmem:[%s376] sm:$0x7]
        %v512 = vunpack.c.l.b16 %v447
        %v513 = vunpack.c.h.b16 %v447
        %v514 = vunpack.c.l.b16 %v448
        %v515 = vunpack.c.l.b16 %v449
        %v516 = vunpack.c.h.b16 %v449
        %v517 = vunpack.c.l.b16 %v450
        %v518 = vunpack.c.l.b16 %v451
        %v519 = vunpack.c.h.b16 %v451
        %v520 = vunpack.c.l.b16 %v452
        %v521 = vunpack.c.l.b16 %v453
        %v522 = vunpack.c.h.b16 %v453
        %v523 = vunpack.c.l.b16 %v454
        %v524 = vunpack.c.l.b16 %v455
        %v525 = vunpack.c.h.b16 %v455
        %v526 = vunpack.c.l.b16 %v456
        %v527 = vunpack.c.l.b16 %v457
        %v528 = vunpack.c.h.b16 %v457
        %v529 = vunpack.c.l.b16 %v458
        %v530 = vunpack.c.l.b16 %v459
        %v531 = vunpack.c.h.b16 %v459
        %v532 = vunpack.c.l.b16 %v460
        %v533 = vunpack.c.l.b16 %v461
        %v534 = vunpack.c.h.b16 %v461
        %v535 = vunpack.c.l.b16 %v462
        %v536 = vunpack.c.l.b16 %v463
        %v537 = vunpack.c.h.b16 %v463
        %v538 = vunpack.c.l.b16 %v464
        %v539 = vunpack.c.l.b16 %v465
        %v540 = vunpack.c.h.b16 %v465
        %v541 = vunpack.c.l.b16 %v466
        %v542 = vunpack.c.l.b16 %v467
        %v543 = vunpack.c.h.b16 %v467
        %v544 = vunpack.c.l.b16 %v468
        %v545 = vunpack.c.l.b16 %v469
        %v546 = vunpack.c.h.b16 %v469
        %v547 = vunpack.c.l.b16 %v470
        %v548 = vunpack.c.l.b16 %v471
        %v549 = vunpack.c.h.b16 %v471
        %v550 = vunpack.c.l.b16 %v472
        %v551 = vunpack.c.l.b16 %v473
        %v552 = vunpack.c.h.b16 %v473
        %v553 = vunpack.c.l.b16 %v474
        %v554 = vunpack.c.l.b16 %v475
        %v555 = vunpack.c.h.b16 %v475
        %v556 = vunpack.c.l.b16 %v476
        %v557 = vunpack.c.l.b16 %v477
        %v558 = vunpack.c.h.b16 %v477
        %v559 = vunpack.c.l.b16 %v478
        %v560 = vpack.c.b16 %v515, %v512
        %v561 = vpack.c.b16 %v516, %v513
        %v562 = vpack.c.b16 %v517, %v514
        %v563 = vpack.c.b16 %v521, %v518
        %v564 = vpack.c.b16 %v522, %v519
        %v565 = vpack.c.b16 %v523, %v520
        %v566 = vpack.c.b16 %v527, %v524
        %v567 = vpack.c.b16 %v528, %v525
        %v568 = vpack.c.b16 %v529, %v526
        %v569 = vpack.c.b16 %v533, %v530
        %v570 = vpack.c.b16 %v534, %v531
        %v571 = vpack.c.b16 %v535, %v532
        %v572 = vpack.c.b16 %v539, %v536
        %v573 = vpack.c.b16 %v540, %v537
        %v574 = vpack.c.b16 %v541, %v538
        %v575 = vpack.c.b16 %v545, %v542
        %v576 = vpack.c.b16 %v546, %v543
        %v577 = vpack.c.b16 %v547, %v544
        %v578 = vpack.c.b16 %v551, %v548
        %v579 = vpack.c.b16 %v552, %v549
        %v580 = vpack.c.b16 %v553, %v550
        %v581 = vpack.c.b16 %v557, %v554
        %v582 = vpack.c.b16 %v558, %v555
        %v583 = vpack.c.b16 %v559, %v556
        %v609 = vperm.slane %v479, 0
        %v610 = vperm.slane %v479, 1
        %v611 = vperm.slane %v479, 2
        %615 = vmatpush.bf16.msra.mxu0 %v581
        %616 = vmatpush.bf16.msra.mxu0 %v578
        %617 = vmatpush.bf16.msra.mxu0 %v575
        %618 = vmatpush.bf16.msra.mxu0 %v572
        %619 = vmatpush.bf16.msra.mxu0 %v569
        %620 = vmatpush.bf16.msra.mxu0 %v566
        %621 = vmatpush.bf16.msra.mxu0 %v563
        %622 = vmatpush.bf16.msra.mxu0 %v560
        %623 = vmatmul.bf16.gmra.mxu0 %v446
        %v624 = vpop.f32.mrf.mxu0
        %v625 = vadd.f32 %v609, %v624
        %v626 = vpop.f32.mrf.mxu0
        %627 = vdwg.mxu0
        %628 = vmatpush.bf16.msra.mxu0 %v582
        %629 = vmatpush.bf16.msra.mxu0 %v579
        %630 = vmatpush.bf16.msra.mxu0 %v576
        %631 = vmatpush.bf16.msra.mxu0 %v573
        %632 = vmatpush.bf16.msra.mxu0 %v570
        %633 = vmatpush.bf16.msra.mxu0 %v567
        %634 = vmatpush.bf16.msra.mxu0 %v564
        %635 = vmatpush.bf16.msra.mxu0 %v561
        %636 = vmatmul.bf16.gmra.mxu0 %v446
        %v637 = vpop.f32.mrf.mxu0
        %v638 = vadd.f32 %v610, %v637
        %v639 = vpop.f32.mrf.mxu0
        %640 = vdwg.mxu0
        %641 = vmatpush.bf16.msra.mxu0 %v583
        %642 = vmatpush.bf16.msra.mxu0 %v580
        %643 = vmatpush.bf16.msra.mxu0 %v577
        %644 = vmatpush.bf16.msra.mxu0 %v574
        %645 = vmatpush.bf16.msra.mxu0 %v571
        %646 = vmatpush.bf16.msra.mxu0 %v568
        %647 = vmatpush.bf16.msra.mxu0 %v565
        %648 = vmatpush.bf16.msra.mxu0 %v562
        %649 = vmatmul.bf16.gmra.mxu0 %v446
        %v650 = vpop.f32.mrf.mxu0
        %v651 = vadd.f32 %v611, %v650
        %v652 = vpop.f32.mrf.mxu0
        %653 = vdwg.mxu0
        %v654 = vmul.f32 %v625, 0.01
        %v655 = vmul.f32 %v638, 0.01
        %v656 = vmul.f32 %v651, 0.01
        %v657 = vmax.f32 %v625, %v654
        %v658 = vmax.f32 %v638, %v655
        %v659 = vmax.f32 %v651, %v656
        %v660 = vld [vmem:[#allocation2] sm:$0xff]
        %v661 = vld [vmem:[#allocation2 + $0x8] sm:$0x1]
        %v662 = vpack.c.bf16 %v657, %v657
        %v663 = vpack.c.bf16 %v658, %v658
        %v664 = vpack.c.bf16 %v659, %v659
        %v665 = vld [vmem:[%s386] sm:$0xff]
        %v666 = vld [vmem:[%s386 + $0x8] sm:$0xff]
        %v667 = vld [vmem:[%s386 + $0x10] sm:$0xff]
        %v668 = vld [vmem:[%s386 + $0x18] sm:$0xff]
        %v669 = vld [vmem:[%s386 + $0x20] sm:$0xf]
        %v670 = vld [vmem:[%s386 + $0x24] sm:$0xff]
        %v671 = vld [vmem:[%s386 + $0x2c] sm:$0xff]
        %v672 = vld [vmem:[%s386 + $0x34] sm:$0xff]
        %v673 = vld [vmem:[%s386 + $0x3c] sm:$0xff]
        %v674 = vld [vmem:[%s386 + $0x44] sm:$0xf]
        %v675 = vld [vmem:[%s386 + $0x48] sm:$0xff]
        %v676 = vld [vmem:[%s386 + $0x50] sm:$0xff]
        %v677 = vld [vmem:[%s386 + $0x58] sm:$0xff]
        %v678 = vld [vmem:[%s386 + $0x60] sm:$0xff]
        %v679 = vld [vmem:[%s386 + $0x68] sm:$0xf]
        %v680 = vld [vmem:[%s386 + $0x6c] sm:$0xff]
        %v681 = vld [vmem:[%s386 + $0x74] sm:$0xff]
        %v682 = vld [vmem:[%s386 + $0x7c] sm:$0xff]
        %v683 = vld [vmem:[%s386 + $0x84] sm:$0xff]
        %v684 = vld [vmem:[%s386 + $0x8c] sm:$0xf]
        %v685 = vld [vmem:[%s386 + $0x90] sm:$0xff]
        %v686 = vld [vmem:[%s386 + $0x98] sm:$0xff]
        %v687 = vld [vmem:[%s386 + $0xa0] sm:$0xff]
        %v688 = vld [vmem:[%s386 + $0xa8] sm:$0xff]
        %v689 = vld [vmem:[%s386 + $0xb0] sm:$0xf]
        %v690 = vld [vmem:[%s386 + $0xb4] sm:$0xff]
        %v691 = vld [vmem:[%s386 + $0xbc] sm:$0xff]
        %v692 = vld [vmem:[%s386 + $0xc4] sm:$0xff]
        %v693 = vld [vmem:[%s386 + $0xcc] sm:$0xff]
        %v694 = vld [vmem:[%s386 + $0xd4] sm:$0xf]
        %v695 = vld [vmem:[%s386 + $0xd8] sm:$0xff]
        %v696 = vld [vmem:[%s386 + $0xe0] sm:$0xff]
        %v697 = vld [vmem:[%s386 + $0xe8] sm:$0xff]
        %v698 = vld [vmem:[%s386 + $0xf0] sm:$0xff]
        %v699 = vld [vmem:[%s386 + $0xf8] sm:$0xf]
        %v700 = vld [vmem:[%s386 + $0xfc] sm:$0xff]
        %v701 = vld [vmem:[%s386 + $0x104] sm:$0xff]
        %v702 = vld [vmem:[%s386 + $0x10c] sm:$0xff]
        %v703 = vld [vmem:[%s386 + $0x114] sm:$0xff]
        %v704 = vld [vmem:[%s386 + $0x11c] sm:$0xf]
        %v705 = vld [vmem:[%s386 + $0x120] sm:$0xff]
        %v706 = vld [vmem:[%s386 + $0x128] sm:$0xff]
        %v707 = vld [vmem:[%s386 + $0x130] sm:$0xff]
        %v708 = vld [vmem:[%s386 + $0x138] sm:$0xff]
        %v709 = vld [vmem:[%s386 + $0x140] sm:$0xf]
        %v710 = vld [vmem:[%s386 + $0x144] sm:$0xff]
        %v711 = vld [vmem:[%s386 + $0x14c] sm:$0xff]
        %v712 = vld [vmem:[%s386 + $0x154] sm:$0xff]
        %v713 = vld [vmem:[%s386 + $0x15c] sm:$0xff]
        %v714 = vld [vmem:[%s386 + $0x164] sm:$0xf]
        %v715 = vld [vmem:[%s386 + $0x168] sm:$0xff]
        %v716 = vld [vmem:[%s386 + $0x170] sm:$0xff]
        %v717 = vld [vmem:[%s386 + $0x178] sm:$0xff]
        %v718 = vld [vmem:[%s386 + $0x180] sm:$0xff]
        %v719 = vld [vmem:[%s386 + $0x188] sm:$0xf]
        %v720 = vld [vmem:[%s386 + $0x18c] sm:$0xff]
        %v721 = vld [vmem:[%s386 + $0x194] sm:$0xff]
        %v722 = vld [vmem:[%s386 + $0x19c] sm:$0xff]
        %v723 = vld [vmem:[%s386 + $0x1a4] sm:$0xff]
        %v724 = vld [vmem:[%s386 + $0x1ac] sm:$0xf]
        %v725 = vld [vmem:[%s386 + $0x1b0] sm:$0xff]
        %v726 = vld [vmem:[%s386 + $0x1b8] sm:$0xff]
        %v727 = vld [vmem:[%s386 + $0x1c0] sm:$0xff]
        %v728 = vld [vmem:[%s386 + $0x1c8] sm:$0xff]
        %v729 = vld [vmem:[%s386 + $0x1d0] sm:$0xf]
        %v730 = vld [vmem:[%s386 + $0x1d4] sm:$0xff]
        %v731 = vld [vmem:[%s386 + $0x1dc] sm:$0xff]
        %v732 = vld [vmem:[%s386 + $0x1e4] sm:$0xff]
        %v733 = vld [vmem:[%s386 + $0x1ec] sm:$0xff]
        %v734 = vld [vmem:[%s386 + $0x1f4] sm:$0xf]
        %v735 = vld [vmem:[%s386 + $0x1f8] sm:$0xff]
        %v736 = vld [vmem:[%s386 + $0x200] sm:$0xff]
        %v737 = vld [vmem:[%s386 + $0x208] sm:$0xff]
        %v738 = vld [vmem:[%s386 + $0x210] sm:$0xff]
        %v739 = vld [vmem:[%s386 + $0x218] sm:$0xf]
        %v740 = vld [vmem:[%s386 + $0x21c] sm:$0xff]
        %v741 = vld [vmem:[%s386 + $0x224] sm:$0xff]
        %v742 = vld [vmem:[%s386 + $0x22c] sm:$0xff]
        %v743 = vld [vmem:[%s386 + $0x234] sm:$0xff]
        %v744 = vld [vmem:[%s386 + $0x23c] sm:$0xf]
        %v745 = vld [vmem:[%s386 + $0x240] sm:$0xff]
        %v746 = vld [vmem:[%s386 + $0x248] sm:$0xff]
        %v747 = vld [vmem:[%s386 + $0x250] sm:$0xff]
        %v748 = vld [vmem:[%s386 + $0x258] sm:$0xff]
        %v749 = vld [vmem:[%s386 + $0x260] sm:$0xf]
        %v750 = vld [vmem:[%s386 + $0x264] sm:$0xff]
        %v751 = vld [vmem:[%s386 + $0x26c] sm:$0xff]
        %v752 = vld [vmem:[%s386 + $0x274] sm:$0xff]
        %v753 = vld [vmem:[%s386 + $0x27c] sm:$0xff]
        %v754 = vld [vmem:[%s386 + $0x284] sm:$0xf]
        %v755 = vld [vmem:[%s386 + $0x288] sm:$0xff]
        %v756 = vld [vmem:[%s386 + $0x290] sm:$0xff]
        %v757 = vld [vmem:[%s386 + $0x298] sm:$0xff]
        %v758 = vld [vmem:[%s386 + $0x2a0] sm:$0xff]
        %v759 = vld [vmem:[%s386 + $0x2a8] sm:$0xf]
        %v760 = vld [vmem:[%s386 + $0x2ac] sm:$0xff]
        %v761 = vld [vmem:[%s386 + $0x2b4] sm:$0xff]
        %v762 = vld [vmem:[%s386 + $0x2bc] sm:$0xff]
        %v763 = vld [vmem:[%s386 + $0x2c4] sm:$0xff]
        %v764 = vld [vmem:[%s386 + $0x2cc] sm:$0xf]
        %v765 = vld [vmem:[%s386 + $0x2d0] sm:$0xff]
        %v766 = vld [vmem:[%s386 + $0x2d8] sm:$0xff]
        %v767 = vld [vmem:[%s386 + $0x2e0] sm:$0xff]
        %v768 = vld [vmem:[%s386 + $0x2e8] sm:$0xff]
        %v769 = vld [vmem:[%s386 + $0x2f0] sm:$0xf]
        %v770 = vld [vmem:[%s386 + $0x2f4] sm:$0xff]
        %v771 = vld [vmem:[%s386 + $0x2fc] sm:$0xff]
        %v772 = vld [vmem:[%s386 + $0x304] sm:$0xff]
        %v773 = vld [vmem:[%s386 + $0x30c] sm:$0xff]
        %v774 = vld [vmem:[%s386 + $0x314] sm:$0xf]
        %v775 = vld [vmem:[%s386 + $0x318] sm:$0xff]
        %v776 = vld [vmem:[%s386 + $0x320] sm:$0xff]
        %v777 = vld [vmem:[%s386 + $0x328] sm:$0xff]
        %v778 = vld [vmem:[%s386 + $0x330] sm:$0xff]
        %v779 = vld [vmem:[%s386 + $0x338] sm:$0xf]
        %v780 = vld [vmem:[%s386 + $0x33c] sm:$0xff]
        %v781 = vld [vmem:[%s386 + $0x344] sm:$0xff]
        %v782 = vld [vmem:[%s386 + $0x34c] sm:$0xff]
        %v783 = vld [vmem:[%s386 + $0x354] sm:$0xff]
        %v784 = vld [vmem:[%s386 + $0x35c] sm:$0xf]
        %v785 = vld [vmem:[%s386 + $0x360] sm:$0xff]
        %v786 = vld [vmem:[%s386 + $0x368] sm:$0xff]
        %v787 = vld [vmem:[%s386 + $0x370] sm:$0xff]
        %v788 = vld [vmem:[%s386 + $0x378] sm:$0xff]
        %v789 = vld [vmem:[%s386 + $0x380] sm:$0xf]
        %v790 = vld [vmem:[%s386 + $0x384] sm:$0xff]
        %v791 = vld [vmem:[%s386 + $0x38c] sm:$0xff]
        %v792 = vld [vmem:[%s386 + $0x394] sm:$0xff]
        %v793 = vld [vmem:[%s386 + $0x39c] sm:$0xff]
        %v794 = vld [vmem:[%s386 + $0x3a4] sm:$0xf]
        %v795 = vld [vmem:[%s386 + $0x3a8] sm:$0xff]
        %v796 = vld [vmem:[%s386 + $0x3b0] sm:$0xff]
        %v797 = vld [vmem:[%s386 + $0x3b8] sm:$0xff]
        %v798 = vld [vmem:[%s386 + $0x3c0] sm:$0xff]
        %v799 = vld [vmem:[%s386 + $0x3c8] sm:$0xf]
        %v800 = vld [vmem:[%s386 + $0x3cc] sm:$0xff]
        %v801 = vld [vmem:[%s386 + $0x3d4] sm:$0xff]
        %v802 = vld [vmem:[%s386 + $0x3dc] sm:$0xff]
        %v803 = vld [vmem:[%s386 + $0x3e4] sm:$0xff]
        %v804 = vld [vmem:[%s386 + $0x3ec] sm:$0xf]
        %v805 = vld [vmem:[%s386 + $0x3f0] sm:$0xff]
        %v806 = vld [vmem:[%s386 + $0x3f8] sm:$0xff]
        %v807 = vld [vmem:[%s386 + $0x400] sm:$0xff]
        %v808 = vld [vmem:[%s386 + $0x408] sm:$0xff]
        %v809 = vld [vmem:[%s386 + $0x410] sm:$0xf]
        %v810 = vld [vmem:[%s386 + $0x414] sm:$0xff]
        %v811 = vld [vmem:[%s386 + $0x41c] sm:$0xff]
        %v812 = vld [vmem:[%s386 + $0x424] sm:$0xff]
        %v813 = vld [vmem:[%s386 + $0x42c] sm:$0xff]
        %v814 = vld [vmem:[%s386 + $0x434] sm:$0xf]
        %v815 = vld [vmem:[%s386 + $0x438] sm:$0xff]
        %v816 = vld [vmem:[%s386 + $0x440] sm:$0xff]
        %v817 = vld [vmem:[%s386 + $0x448] sm:$0xff]
        %v818 = vld [vmem:[%s386 + $0x450] sm:$0xff]
        %v819 = vld [vmem:[%s386 + $0x458] sm:$0xf]
        %v820 = vld [vmem:[%s386 + $0x45c] sm:$0xff]
        %v821 = vld [vmem:[%s386 + $0x464] sm:$0xff]
        %v822 = vld [vmem:[%s386 + $0x46c] sm:$0xff]
        %v823 = vld [vmem:[%s386 + $0x474] sm:$0xff]
        %v824 = vld [vmem:[%s386 + $0x47c] sm:$0xf]
        %v825 = vld [vmem:[%s386 + $0x480] sm:$0xff]
        %v826 = vld [vmem:[%s386 + $0x488] sm:$0xff]
        %v827 = vld [vmem:[%s386 + $0x490] sm:$0xff]
        %v828 = vld [vmem:[%s386 + $0x498] sm:$0xff]
        %v829 = vld [vmem:[%s386 + $0x4a0] sm:$0xf]
        %v830 = vld [vmem:[%s386 + $0x4a4] sm:$0xff]
        %v831 = vld [vmem:[%s386 + $0x4ac] sm:$0xff]
        %v832 = vld [vmem:[%s386 + $0x4b4] sm:$0xff]
        %v833 = vld [vmem:[%s386 + $0x4bc] sm:$0xff]
        %v834 = vld [vmem:[%s386 + $0x4c4] sm:$0xf]
        %v835 = vld [vmem:[%s386 + $0x4c8] sm:$0xff]
        %v836 = vld [vmem:[%s386 + $0x4d0] sm:$0xff]
        %v837 = vld [vmem:[%s386 + $0x4d8] sm:$0xff]
        %v838 = vld [vmem:[%s386 + $0x4e0] sm:$0xff]
        %v839 = vld [vmem:[%s386 + $0x4e8] sm:$0xf]
        %v840 = vld [vmem:[%s386 + $0x4ec] sm:$0xff]
        %v841 = vld [vmem:[%s386 + $0x4f4] sm:$0xff]
        %v842 = vld [vmem:[%s386 + $0x4fc] sm:$0xff]
        %v843 = vld [vmem:[%s386 + $0x504] sm:$0xff]
        %v844 = vld [vmem:[%s386 + $0x50c] sm:$0xf]
        %v845 = vld [vmem:[%s386 + $0x510] sm:$0xff]
        %v846 = vld [vmem:[%s386 + $0x518] sm:$0xff]
        %v847 = vld [vmem:[%s386 + $0x520] sm:$0xff]
        %v848 = vld [vmem:[%s386 + $0x528] sm:$0xff]
        %v849 = vld [vmem:[%s386 + $0x530] sm:$0xf]
        %v850 = vld [vmem:[%s386 + $0x534] sm:$0xff]
        %v851 = vld [vmem:[%s386 + $0x53c] sm:$0xff]
        %v852 = vld [vmem:[%s386 + $0x544] sm:$0xff]
        %v853 = vld [vmem:[%s386 + $0x54c] sm:$0xff]
        %v854 = vld [vmem:[%s386 + $0x554] sm:$0xf]
        %v855 = vld [vmem:[%s386 + $0x558] sm:$0xff]
        %v856 = vld [vmem:[%s386 + $0x560] sm:$0xff]
        %v857 = vld [vmem:[%s386 + $0x568] sm:$0xff]
        %v858 = vld [vmem:[%s386 + $0x570] sm:$0xff]
        %v859 = vld [vmem:[%s386 + $0x578] sm:$0xf]
        %v860 = vld [vmem:[%s386 + $0x57c] sm:$0xff]
        %v861 = vld [vmem:[%s386 + $0x584] sm:$0xff]
        %v862 = vld [vmem:[%s386 + $0x58c] sm:$0xff]
        %v863 = vld [vmem:[%s386 + $0x594] sm:$0xff]
        %v864 = vld [vmem:[%s386 + $0x59c] sm:$0xf]
        %v865 = vld [vmem:[%s386 + $0x5a0] sm:$0xff]
        %v866 = vld [vmem:[%s386 + $0x5a8] sm:$0xff]
        %v867 = vld [vmem:[%s386 + $0x5b0] sm:$0xff]
        %v868 = vld [vmem:[%s386 + $0x5b8] sm:$0xff]
        %v869 = vld [vmem:[%s386 + $0x5c0] sm:$0xf]
        %v870 = vld [vmem:[%s386 + $0x5c4] sm:$0xff]
        %v871 = vld [vmem:[%s386 + $0x5cc] sm:$0xff]
        %v872 = vld [vmem:[%s386 + $0x5d4] sm:$0xff]
        %v873 = vld [vmem:[%s386 + $0x5dc] sm:$0xff]
        %v874 = vld [vmem:[%s386 + $0x5e4] sm:$0xf]
        %v875 = vld [vmem:[%s386 + $0x5e8] sm:$0xff]
        %v876 = vld [vmem:[%s386 + $0x5f0] sm:$0xff]
        %v877 = vld [vmem:[%s386 + $0x5f8] sm:$0xff]
        %v878 = vld [vmem:[%s386 + $0x600] sm:$0xff]
        %v879 = vld [vmem:[%s386 + $0x608] sm:$0xf]
        %v880 = vld [vmem:[%s386 + $0x60c] sm:$0xff]
        %v881 = vld [vmem:[%s386 + $0x614] sm:$0xff]
        %v882 = vld [vmem:[%s386 + $0x61c] sm:$0xff]
        %v883 = vld [vmem:[%s386 + $0x624] sm:$0xff]
        %v884 = vld [vmem:[%s386 + $0x62c] sm:$0xf]
        %v885 = vld [vmem:[%s386 + $0x630] sm:$0xff]
        %v886 = vld [vmem:[%s386 + $0x638] sm:$0xff]
        %v887 = vld [vmem:[%s386 + $0x640] sm:$0xff]
        %v888 = vld [vmem:[%s386 + $0x648] sm:$0xff]
        %v889 = vld [vmem:[%s386 + $0x650] sm:$0xf]
        %v890 = vld [vmem:[%s386 + $0x654] sm:$0xff]
        %v891 = vld [vmem:[%s386 + $0x65c] sm:$0xff]
        %v892 = vld [vmem:[%s386 + $0x664] sm:$0xff]
        %v893 = vld [vmem:[%s386 + $0x66c] sm:$0xff]
        %v894 = vld [vmem:[%s386 + $0x674] sm:$0xf]
        %v895 = vld [vmem:[%s386 + $0x678] sm:$0xff]
        %v896 = vld [vmem:[%s386 + $0x680] sm:$0xff]
        %v897 = vld [vmem:[%s386 + $0x688] sm:$0xff]
        %v898 = vld [vmem:[%s386 + $0x690] sm:$0xff]
        %v899 = vld [vmem:[%s386 + $0x698] sm:$0xf]
        %v900 = vld [vmem:[%s386 + $0x69c] sm:$0xff]
        %v901 = vld [vmem:[%s386 + $0x6a4] sm:$0xff]
        %v902 = vld [vmem:[%s386 + $0x6ac] sm:$0xff]
        %v903 = vld [vmem:[%s386 + $0x6b4] sm:$0xff]
        %v904 = vld [vmem:[%s386 + $0x6bc] sm:$0xf]
        %v1145 = vunpack.c.l.b16 %v665
        %v1146 = vunpack.c.h.b16 %v665
        %v1147 = vunpack.c.l.b16 %v666
        %v1148 = vunpack.c.h.b16 %v666
        %v1149 = vunpack.c.l.b16 %v667
        %v1150 = vunpack.c.h.b16 %v667
        %v1151 = vunpack.c.l.b16 %v668
        %v1152 = vunpack.c.h.b16 %v668
        %v1153 = vunpack.c.l.b16 %v669
        %v1154 = vunpack.c.l.b16 %v670
        %v1155 = vunpack.c.h.b16 %v670
        %v1156 = vunpack.c.l.b16 %v671
        %v1157 = vunpack.c.h.b16 %v671
        %v1158 = vunpack.c.l.b16 %v672
        %v1159 = vunpack.c.h.b16 %v672
        %v1160 = vunpack.c.l.b16 %v673
        %v1161 = vunpack.c.h.b16 %v673
        %v1162 = vunpack.c.l.b16 %v674
        %v1163 = vunpack.c.l.b16 %v675
        %v1164 = vunpack.c.h.b16 %v675
        %v1165 = vunpack.c.l.b16 %v676
        %v1166 = vunpack.c.h.b16 %v676
        %v1167 = vunpack.c.l.b16 %v677
        %v1168 = vunpack.c.h.b16 %v677
        %v1169 = vunpack.c.l.b16 %v678
        %v1170 = vunpack.c.h.b16 %v678
        %v1171 = vunpack.c.l.b16 %v679
        %v1172 = vunpack.c.l.b16 %v680
        %v1173 = vunpack.c.h.b16 %v680
        %v1174 = vunpack.c.l.b16 %v681
        %v1175 = vunpack.c.h.b16 %v681
        %v1176 = vunpack.c.l.b16 %v682
        %v1177 = vunpack.c.h.b16 %v682
        %v1178 = vunpack.c.l.b16 %v683
        %v1179 = vunpack.c.h.b16 %v683
        %v1180 = vunpack.c.l.b16 %v684
        %v1181 = vunpack.c.l.b16 %v685
        %v1182 = vunpack.c.h.b16 %v685
        %v1183 = vunpack.c.l.b16 %v686
        %v1184 = vunpack.c.h.b16 %v686
        %v1185 = vunpack.c.l.b16 %v687
        %v1186 = vunpack.c.h.b16 %v687
        %v1187 = vunpack.c.l.b16 %v688
        %v1188 = vunpack.c.h.b16 %v688
        %v1189 = vunpack.c.l.b16 %v689
        %v1190 = vunpack.c.l.b16 %v690
        %v1191 = vunpack.c.h.b16 %v690
        %v1192 = vunpack.c.l.b16 %v691
        %v1193 = vunpack.c.h.b16 %v691
        %v1194 = vunpack.c.l.b16 %v692
        %v1195 = vunpack.c.h.b16 %v692
        %v1196 = vunpack.c.l.b16 %v693
        %v1197 = vunpack.c.h.b16 %v693
        %v1198 = vunpack.c.l.b16 %v694
        %v1199 = vunpack.c.l.b16 %v695
        %v1200 = vunpack.c.h.b16 %v695
        %v1201 = vunpack.c.l.b16 %v696
        %v1202 = vunpack.c.h.b16 %v696
        %v1203 = vunpack.c.l.b16 %v697
        %v1204 = vunpack.c.h.b16 %v697
        %v1205 = vunpack.c.l.b16 %v698
        %v1206 = vunpack.c.h.b16 %v698
        %v1207 = vunpack.c.l.b16 %v699
        %v1208 = vunpack.c.l.b16 %v700
        %v1209 = vunpack.c.h.b16 %v700
        %v1210 = vunpack.c.l.b16 %v701
        %v1211 = vunpack.c.h.b16 %v701
        %v1212 = vunpack.c.l.b16 %v702
        %v1213 = vunpack.c.h.b16 %v702
        %v1214 = vunpack.c.l.b16 %v703
        %v1215 = vunpack.c.h.b16 %v703
        %v1216 = vunpack.c.l.b16 %v704
        %v1217 = vunpack.c.l.b16 %v705
        %v1218 = vunpack.c.h.b16 %v705
        %v1219 = vunpack.c.l.b16 %v706
        %v1220 = vunpack.c.h.b16 %v706
        %v1221 = vunpack.c.l.b16 %v707
        %v1222 = vunpack.c.h.b16 %v707
        %v1223 = vunpack.c.l.b16 %v708
        %v1224 = vunpack.c.h.b16 %v708
        %v1225 = vunpack.c.l.b16 %v709
        %v1226 = vunpack.c.l.b16 %v710
        %v1227 = vunpack.c.h.b16 %v710
        %v1228 = vunpack.c.l.b16 %v711
        %v1229 = vunpack.c.h.b16 %v711
        %v1230 = vunpack.c.l.b16 %v712
        %v1231 = vunpack.c.h.b16 %v712
        %v1232 = vunpack.c.l.b16 %v713
        %v1233 = vunpack.c.h.b16 %v713
        %v1234 = vunpack.c.l.b16 %v714
        %v1235 = vunpack.c.l.b16 %v715
        %v1236 = vunpack.c.h.b16 %v715
        %v1237 = vunpack.c.l.b16 %v716
        %v1238 = vunpack.c.h.b16 %v716
        %v1239 = vunpack.c.l.b16 %v717
        %v1240 = vunpack.c.h.b16 %v717
        %v1241 = vunpack.c.l.b16 %v718
        %v1242 = vunpack.c.h.b16 %v718
        %v1243 = vunpack.c.l.b16 %v719
        %v1244 = vunpack.c.l.b16 %v720
        %v1245 = vunpack.c.h.b16 %v720
        %v1246 = vunpack.c.l.b16 %v721
        %v1247 = vunpack.c.h.b16 %v721
        %v1248 = vunpack.c.l.b16 %v722
        %v1249 = vunpack.c.h.b16 %v722
        %v1250 = vunpack.c.l.b16 %v723
        %v1251 = vunpack.c.h.b16 %v723
        %v1252 = vunpack.c.l.b16 %v724
        %v1253 = vunpack.c.l.b16 %v725
        %v1254 = vunpack.c.h.b16 %v725
        %v1255 = vunpack.c.l.b16 %v726
        %v1256 = vunpack.c.h.b16 %v726
        %v1257 = vunpack.c.l.b16 %v727
        %v1258 = vunpack.c.h.b16 %v727
        %v1259 = vunpack.c.l.b16 %v728
        %v1260 = vunpack.c.h.b16 %v728
        %v1261 = vunpack.c.l.b16 %v729
        %v1262 = vunpack.c.l.b16 %v730
        %v1263 = vunpack.c.h.b16 %v730
        %v1264 = vunpack.c.l.b16 %v731
        %v1265 = vunpack.c.h.b16 %v731
        %v1266 = vunpack.c.l.b16 %v732
        %v1267 = vunpack.c.h.b16 %v732
        %v1268 = vunpack.c.l.b16 %v733
        %v1269 = vunpack.c.h.b16 %v733
        %v1270 = vunpack.c.l.b16 %v734
        %v1271 = vunpack.c.l.b16 %v735
        %v1272 = vunpack.c.h.b16 %v735
        %v1273 = vunpack.c.l.b16 %v736
        %v1274 = vunpack.c.h.b16 %v736
        %v1275 = vunpack.c.l.b16 %v737
        %v1276 = vunpack.c.h.b16 %v737
        %v1277 = vunpack.c.l.b16 %v738
        %v1278 = vunpack.c.h.b16 %v738
        %v1279 = vunpack.c.l.b16 %v739
        %v1280 = vunpack.c.l.b16 %v740
        %v1281 = vunpack.c.h.b16 %v740
        %v1282 = vunpack.c.l.b16 %v741
        %v1283 = vunpack.c.h.b16 %v741
        %v1284 = vunpack.c.l.b16 %v742
        %v1285 = vunpack.c.h.b16 %v742
        %v1286 = vunpack.c.l.b16 %v743
        %v1287 = vunpack.c.h.b16 %v743
        %v1288 = vunpack.c.l.b16 %v744
        %v1289 = vunpack.c.l.b16 %v745
        %v1290 = vunpack.c.h.b16 %v745
        %v1291 = vunpack.c.l.b16 %v746
        %v1292 = vunpack.c.h.b16 %v746
        %v1293 = vunpack.c.l.b16 %v747
        %v1294 = vunpack.c.h.b16 %v747
        %v1295 = vunpack.c.l.b16 %v748
        %v1296 = vunpack.c.h.b16 %v748
        %v1297 = vunpack.c.l.b16 %v749
        %v1298 = vunpack.c.l.b16 %v750
        %v1299 = vunpack.c.h.b16 %v750
        %v1300 = vunpack.c.l.b16 %v751
        %v1301 = vunpack.c.h.b16 %v751
        %v1302 = vunpack.c.l.b16 %v752
        %v1303 = vunpack.c.h.b16 %v752
        %v1304 = vunpack.c.l.b16 %v753
        %v1305 = vunpack.c.h.b16 %v753
        %v1306 = vunpack.c.l.b16 %v754
        %v1307 = vunpack.c.l.b16 %v755
        %v1308 = vunpack.c.h.b16 %v755
        %v1309 = vunpack.c.l.b16 %v756
        %v1310 = vunpack.c.h.b16 %v756
        %v1311 = vunpack.c.l.b16 %v757
        %v1312 = vunpack.c.h.b16 %v757
        %v1313 = vunpack.c.l.b16 %v758
        %v1314 = vunpack.c.h.b16 %v758
        %v1315 = vunpack.c.l.b16 %v759
        %v1316 = vunpack.c.l.b16 %v760
        %v1317 = vunpack.c.h.b16 %v760
        %v1318 = vunpack.c.l.b16 %v761
        %v1319 = vunpack.c.h.b16 %v761
        %v1320 = vunpack.c.l.b16 %v762
        %v1321 = vunpack.c.h.b16 %v762
        %v1322 = vunpack.c.l.b16 %v763
        %v1323 = vunpack.c.h.b16 %v763
        %v1324 = vunpack.c.l.b16 %v764
        %v1325 = vunpack.c.l.b16 %v765
        %v1326 = vunpack.c.h.b16 %v765
        %v1327 = vunpack.c.l.b16 %v766
        %v1328 = vunpack.c.h.b16 %v766
        %v1329 = vunpack.c.l.b16 %v767
        %v1330 = vunpack.c.h.b16 %v767
        %v1331 = vunpack.c.l.b16 %v768
        %v1332 = vunpack.c.h.b16 %v768
        %v1333 = vunpack.c.l.b16 %v769
        %v1334 = vunpack.c.l.b16 %v770
        %v1335 = vunpack.c.h.b16 %v770
        %v1336 = vunpack.c.l.b16 %v771
        %v1337 = vunpack.c.h.b16 %v771
        %v1338 = vunpack.c.l.b16 %v772
        %v1339 = vunpack.c.h.b16 %v772
        %v1340 = vunpack.c.l.b16 %v773
        %v1341 = vunpack.c.h.b16 %v773
        %v1342 = vunpack.c.l.b16 %v774
        %v1343 = vunpack.c.l.b16 %v775
        %v1344 = vunpack.c.h.b16 %v775
        %v1345 = vunpack.c.l.b16 %v776
        %v1346 = vunpack.c.h.b16 %v776
        %v1347 = vunpack.c.l.b16 %v777
        %v1348 = vunpack.c.h.b16 %v777
        %v1349 = vunpack.c.l.b16 %v778
        %v1350 = vunpack.c.h.b16 %v778
        %v1351 = vunpack.c.l.b16 %v779
        %v1352 = vunpack.c.l.b16 %v780
        %v1353 = vunpack.c.h.b16 %v780
        %v1354 = vunpack.c.l.b16 %v781
        %v1355 = vunpack.c.h.b16 %v781
        %v1356 = vunpack.c.l.b16 %v782
        %v1357 = vunpack.c.h.b16 %v782
        %v1358 = vunpack.c.l.b16 %v783
        %v1359 = vunpack.c.h.b16 %v783
        %v1360 = vunpack.c.l.b16 %v784
        %v1361 = vunpack.c.l.b16 %v785
        %v1362 = vunpack.c.h.b16 %v785
        %v1363 = vunpack.c.l.b16 %v786
        %v1364 = vunpack.c.h.b16 %v786
        %v1365 = vunpack.c.l.b16 %v787
        %v1366 = vunpack.c.h.b16 %v787
        %v1367 = vunpack.c.l.b16 %v788
        %v1368 = vunpack.c.h.b16 %v788
        %v1369 = vunpack.c.l.b16 %v789
        %v1370 = vunpack.c.l.b16 %v790
        %v1371 = vunpack.c.h.b16 %v790
        %v1372 = vunpack.c.l.b16 %v791
        %v1373 = vunpack.c.h.b16 %v791
        %v1374 = vunpack.c.l.b16 %v792
        %v1375 = vunpack.c.h.b16 %v792
        %v1376 = vunpack.c.l.b16 %v793
        %v1377 = vunpack.c.h.b16 %v793
        %v1378 = vunpack.c.l.b16 %v794
        %v1379 = vunpack.c.l.b16 %v795
        %v1380 = vunpack.c.h.b16 %v795
        %v1381 = vunpack.c.l.b16 %v796
        %v1382 = vunpack.c.h.b16 %v796
        %v1383 = vunpack.c.l.b16 %v797
        %v1384 = vunpack.c.h.b16 %v797
        %v1385 = vunpack.c.l.b16 %v798
        %v1386 = vunpack.c.h.b16 %v798
        %v1387 = vunpack.c.l.b16 %v799
        %v1388 = vunpack.c.l.b16 %v800
        %v1389 = vunpack.c.h.b16 %v800
        %v1390 = vunpack.c.l.b16 %v801
        %v1391 = vunpack.c.h.b16 %v801
        %v1392 = vunpack.c.l.b16 %v802
        %v1393 = vunpack.c.h.b16 %v802
        %v1394 = vunpack.c.l.b16 %v803
        %v1395 = vunpack.c.h.b16 %v803
        %v1396 = vunpack.c.l.b16 %v804
        %v1397 = vunpack.c.l.b16 %v805
        %v1398 = vunpack.c.h.b16 %v805
        %v1399 = vunpack.c.l.b16 %v806
        %v1400 = vunpack.c.h.b16 %v806
        %v1401 = vunpack.c.l.b16 %v807
        %v1402 = vunpack.c.h.b16 %v807
        %v1403 = vunpack.c.l.b16 %v808
        %v1404 = vunpack.c.h.b16 %v808
        %v1405 = vunpack.c.l.b16 %v809
        %v1406 = vunpack.c.l.b16 %v810
        %v1407 = vunpack.c.h.b16 %v810
        %v1408 = vunpack.c.l.b16 %v811
        %v1409 = vunpack.c.h.b16 %v811
        %v1410 = vunpack.c.l.b16 %v812
        %v1411 = vunpack.c.h.b16 %v812
        %v1412 = vunpack.c.l.b16 %v813
        %v1413 = vunpack.c.h.b16 %v813
        %v1414 = vunpack.c.l.b16 %v814
        %v1415 = vunpack.c.l.b16 %v815
        %v1416 = vunpack.c.h.b16 %v815
        %v1417 = vunpack.c.l.b16 %v816
        %v1418 = vunpack.c.h.b16 %v816
        %v1419 = vunpack.c.l.b16 %v817
        %v1420 = vunpack.c.h.b16 %v817
        %v1421 = vunpack.c.l.b16 %v818
        %v1422 = vunpack.c.h.b16 %v818
        %v1423 = vunpack.c.l.b16 %v819
        %v1424 = vunpack.c.l.b16 %v820
        %v1425 = vunpack.c.h.b16 %v820
        %v1426 = vunpack.c.l.b16 %v821
        %v1427 = vunpack.c.h.b16 %v821
        %v1428 = vunpack.c.l.b16 %v822
        %v1429 = vunpack.c.h.b16 %v822
        %v1430 = vunpack.c.l.b16 %v823
        %v1431 = vunpack.c.h.b16 %v823
        %v1432 = vunpack.c.l.b16 %v824
        %v1433 = vunpack.c.l.b16 %v825
        %v1434 = vunpack.c.h.b16 %v825
        %v1435 = vunpack.c.l.b16 %v826
        %v1436 = vunpack.c.h.b16 %v826
        %v1437 = vunpack.c.l.b16 %v827
        %v1438 = vunpack.c.h.b16 %v827
        %v1439 = vunpack.c.l.b16 %v828
        %v1440 = vunpack.c.h.b16 %v828
        %v1441 = vunpack.c.l.b16 %v829
        %v1442 = vunpack.c.l.b16 %v830
        %v1443 = vunpack.c.h.b16 %v830
        %v1444 = vunpack.c.l.b16 %v831
        %v1445 = vunpack.c.h.b16 %v831
        %v1446 = vunpack.c.l.b16 %v832
        %v1447 = vunpack.c.h.b16 %v832
        %v1448 = vunpack.c.l.b16 %v833
        %v1449 = vunpack.c.h.b16 %v833
        %v1450 = vunpack.c.l.b16 %v834
        %v1451 = vunpack.c.l.b16 %v835
        %v1452 = vunpack.c.h.b16 %v835
        %v1453 = vunpack.c.l.b16 %v836
        %v1454 = vunpack.c.h.b16 %v836
        %v1455 = vunpack.c.l.b16 %v837
        %v1456 = vunpack.c.h.b16 %v837
        %v1457 = vunpack.c.l.b16 %v838
        %v1458 = vunpack.c.h.b16 %v838
        %v1459 = vunpack.c.l.b16 %v839
        %v1460 = vunpack.c.l.b16 %v840
        %v1461 = vunpack.c.h.b16 %v840
        %v1462 = vunpack.c.l.b16 %v841
        %v1463 = vunpack.c.h.b16 %v841
        %v1464 = vunpack.c.l.b16 %v842
        %v1465 = vunpack.c.h.b16 %v842
        %v1466 = vunpack.c.l.b16 %v843
        %v1467 = vunpack.c.h.b16 %v843
        %v1468 = vunpack.c.l.b16 %v844
        %v1469 = vunpack.c.l.b16 %v845
        %v1470 = vunpack.c.h.b16 %v845
        %v1471 = vunpack.c.l.b16 %v846
        %v1472 = vunpack.c.h.b16 %v846
        %v1473 = vunpack.c.l.b16 %v847
        %v1474 = vunpack.c.h.b16 %v847
        %v1475 = vunpack.c.l.b16 %v848
        %v1476 = vunpack.c.h.b16 %v848
        %v1477 = vunpack.c.l.b16 %v849
        %v1478 = vunpack.c.l.b16 %v850
        %v1479 = vunpack.c.h.b16 %v850
        %v1480 = vunpack.c.l.b16 %v851
        %v1481 = vunpack.c.h.b16 %v851
        %v1482 = vunpack.c.l.b16 %v852
        %v1483 = vunpack.c.h.b16 %v852
        %v1484 = vunpack.c.l.b16 %v853
        %v1485 = vunpack.c.h.b16 %v853
        %v1486 = vunpack.c.l.b16 %v854
        %v1487 = vunpack.c.l.b16 %v855
        %v1488 = vunpack.c.h.b16 %v855
        %v1489 = vunpack.c.l.b16 %v856
        %v1490 = vunpack.c.h.b16 %v856
        %v1491 = vunpack.c.l.b16 %v857
        %v1492 = vunpack.c.h.b16 %v857
        %v1493 = vunpack.c.l.b16 %v858
        %v1494 = vunpack.c.h.b16 %v858
        %v1495 = vunpack.c.l.b16 %v859
        %v1496 = vunpack.c.l.b16 %v860
        %v1497 = vunpack.c.h.b16 %v860
        %v1498 = vunpack.c.l.b16 %v861
        %v1499 = vunpack.c.h.b16 %v861
        %v1500 = vunpack.c.l.b16 %v862
        %v1501 = vunpack.c.h.b16 %v862
        %v1502 = vunpack.c.l.b16 %v863
        %v1503 = vunpack.c.h.b16 %v863
        %v1504 = vunpack.c.l.b16 %v864
        %v1505 = vunpack.c.l.b16 %v865
        %v1506 = vunpack.c.h.b16 %v865
        %v1507 = vunpack.c.l.b16 %v866
        %v1508 = vunpack.c.h.b16 %v866
        %v1509 = vunpack.c.l.b16 %v867
        %v1510 = vunpack.c.h.b16 %v867
        %v1511 = vunpack.c.l.b16 %v868
        %v1512 = vunpack.c.h.b16 %v868
        %v1513 = vunpack.c.l.b16 %v869
        %v1514 = vunpack.c.l.b16 %v870
        %v1515 = vunpack.c.h.b16 %v870
        %v1516 = vunpack.c.l.b16 %v871
        %v1517 = vunpack.c.h.b16 %v871
        %v1518 = vunpack.c.l.b16 %v872
        %v1519 = vunpack.c.h.b16 %v872
        %v1520 = vunpack.c.l.b16 %v873
        %v1521 = vunpack.c.h.b16 %v873
        %v1522 = vunpack.c.l.b16 %v874
        %v1523 = vunpack.c.l.b16 %v875
        %v1524 = vunpack.c.h.b16 %v875
        %v1525 = vunpack.c.l.b16 %v876
        %v1526 = vunpack.c.h.b16 %v876
        %v1527 = vunpack.c.l.b16 %v877
        %v1528 = vunpack.c.h.b16 %v877
        %v1529 = vunpack.c.l.b16 %v878
        %v1530 = vunpack.c.h.b16 %v878
        %v1531 = vunpack.c.l.b16 %v879
        %v1532 = vunpack.c.l.b16 %v880
        %v1533 = vunpack.c.h.b16 %v880
        %v1534 = vunpack.c.l.b16 %v881
        %v1535 = vunpack.c.h.b16 %v881
        %v1536 = vunpack.c.l.b16 %v882
        %v1537 = vunpack.c.h.b16 %v882
        %v1538 = vunpack.c.l.b16 %v883
        %v1539 = vunpack.c.h.b16 %v883
        %v1540 = vunpack.c.l.b16 %v884
        %v1541 = vunpack.c.l.b16 %v885
        %v1542 = vunpack.c.h.b16 %v885
        %v1543 = vunpack.c.l.b16 %v886
        %v1544 = vunpack.c.h.b16 %v886
        %v1545 = vunpack.c.l.b16 %v887
        %v1546 = vunpack.c.h.b16 %v887
        %v1547 = vunpack.c.l.b16 %v888
        %v1548 = vunpack.c.h.b16 %v888
        %v1549 = vunpack.c.l.b16 %v889
        %v1550 = vunpack.c.l.b16 %v890
        %v1551 = vunpack.c.h.b16 %v890
        %v1552 = vunpack.c.l.b16 %v891
        %v1553 = vunpack.c.h.b16 %v891
        %v1554 = vunpack.c.l.b16 %v892
        %v1555 = vunpack.c.h.b16 %v892
        %v1556 = vunpack.c.l.b16 %v893
        %v1557 = vunpack.c.h.b16 %v893
        %v1558 = vunpack.c.l.b16 %v894
        %v1559 = vunpack.c.l.b16 %v895
        %v1560 = vunpack.c.h.b16 %v895
        %v1561 = vunpack.c.l.b16 %v896
        %v1562 = vunpack.c.h.b16 %v896
        %v1563 = vunpack.c.l.b16 %v897
        %v1564 = vunpack.c.h.b16 %v897
        %v1565 = vunpack.c.l.b16 %v898
        %v1566 = vunpack.c.h.b16 %v898
        %v1567 = vunpack.c.l.b16 %v899
        %v1568 = vunpack.c.l.b16 %v900
        %v1569 = vunpack.c.h.b16 %v900
        %v1570 = vunpack.c.l.b16 %v901
        %v1571 = vunpack.c.h.b16 %v901
        %v1572 = vunpack.c.l.b16 %v902
        %v1573 = vunpack.c.h.b16 %v902
        %v1574 = vunpack.c.l.b16 %v903
        %v1575 = vunpack.c.h.b16 %v903
        %v1576 = vunpack.c.l.b16 %v904
        %v1577 = vpack.c.b16 %v1154, %v1145
        %v1578 = vpack.c.b16 %v1155, %v1146
        %v1579 = vpack.c.b16 %v1156, %v1147
        %v1580 = vpack.c.b16 %v1157, %v1148
        %v1581 = vpack.c.b16 %v1158, %v1149
        %v1582 = vpack.c.b16 %v1159, %v1150
        %v1583 = vpack.c.b16 %v1160, %v1151
        %v1584 = vpack.c.b16 %v1161, %v1152
        %v1585 = vpack.c.b16 %v1162, %v1153
        %v1586 = vpack.c.b16 %v1172, %v1163
        %v1587 = vpack.c.b16 %v1173, %v1164
        %v1588 = vpack.c.b16 %v1174, %v1165
        %v1589 = vpack.c.b16 %v1175, %v1166
        %v1590 = vpack.c.b16 %v1176, %v1167
        %v1591 = vpack.c.b16 %v1177, %v1168
        %v1592 = vpack.c.b16 %v1178, %v1169
        %v1593 = vpack.c.b16 %v1179, %v1170
        %v1594 = vpack.c.b16 %v1180, %v1171
        %v1595 = vpack.c.b16 %v1190, %v1181
        %v1596 = vpack.c.b16 %v1191, %v1182
        %v1597 = vpack.c.b16 %v1192, %v1183
        %v1598 = vpack.c.b16 %v1193, %v1184
        %v1599 = vpack.c.b16 %v1194, %v1185
        %v1600 = vpack.c.b16 %v1195, %v1186
        %v1601 = vpack.c.b16 %v1196, %v1187
        %v1602 = vpack.c.b16 %v1197, %v1188
        %v1603 = vpack.c.b16 %v1198, %v1189
        %v1604 = vpack.c.b16 %v1208, %v1199
        %v1605 = vpack.c.b16 %v1209, %v1200
        %v1606 = vpack.c.b16 %v1210, %v1201
        %v1607 = vpack.c.b16 %v1211, %v1202
        %v1608 = vpack.c.b16 %v1212, %v1203
        %v1609 = vpack.c.b16 %v1213, %v1204
        %v1610 = vpack.c.b16 %v1214, %v1205
        %v1611 = vpack.c.b16 %v1215, %v1206
        %v1612 = vpack.c.b16 %v1216, %v1207
        %v1613 = vpack.c.b16 %v1226, %v1217
        %v1614 = vpack.c.b16 %v1227, %v1218
        %v1615 = vpack.c.b16 %v1228, %v1219
        %v1616 = vpack.c.b16 %v1229, %v1220
        %v1617 = vpack.c.b16 %v1230, %v1221
        %v1618 = vpack.c.b16 %v1231, %v1222
        %v1619 = vpack.c.b16 %v1232, %v1223
        %v1620 = vpack.c.b16 %v1233, %v1224
        %v1621 = vpack.c.b16 %v1234, %v1225
        %v1622 = vpack.c.b16 %v1244, %v1235
        %v1623 = vpack.c.b16 %v1245, %v1236
        %v1624 = vpack.c.b16 %v1246, %v1237
        %v1625 = vpack.c.b16 %v1247, %v1238
        %v1626 = vpack.c.b16 %v1248, %v1239
        %v1627 = vpack.c.b16 %v1249, %v1240
        %v1628 = vpack.c.b16 %v1250, %v1241
        %v1629 = vpack.c.b16 %v1251, %v1242
        %v1630 = vpack.c.b16 %v1252, %v1243
        %v1631 = vpack.c.b16 %v1262, %v1253
        %v1632 = vpack.c.b16 %v1263, %v1254
        %v1633 = vpack.c.b16 %v1264, %v1255
        %v1634 = vpack.c.b16 %v1265, %v1256
        %v1635 = vpack.c.b16 %v1266, %v1257
        %v1636 = vpack.c.b16 %v1267, %v1258
        %v1637 = vpack.c.b16 %v1268, %v1259
        %v1638 = vpack.c.b16 %v1269, %v1260
        %v1639 = vpack.c.b16 %v1270, %v1261
        %v1640 = vpack.c.b16 %v1280, %v1271
        %v1641 = vpack.c.b16 %v1281, %v1272
        %v1642 = vpack.c.b16 %v1282, %v1273
        %v1643 = vpack.c.b16 %v1283, %v1274
        %v1644 = vpack.c.b16 %v1284, %v1275
        %v1645 = vpack.c.b16 %v1285, %v1276
        %v1646 = vpack.c.b16 %v1286, %v1277
        %v1647 = vpack.c.b16 %v1287, %v1278
        %v1648 = vpack.c.b16 %v1288, %v1279
        %v1649 = vpack.c.b16 %v1298, %v1289
        %v1650 = vpack.c.b16 %v1299, %v1290
        %v1651 = vpack.c.b16 %v1300, %v1291
        %v1652 = vpack.c.b16 %v1301, %v1292
        %v1653 = vpack.c.b16 %v1302, %v1293
        %v1654 = vpack.c.b16 %v1303, %v1294
        %v1655 = vpack.c.b16 %v1304, %v1295
        %v1656 = vpack.c.b16 %v1305, %v1296
        %v1657 = vpack.c.b16 %v1306, %v1297
        %v1658 = vpack.c.b16 %v1316, %v1307
        %v1659 = vpack.c.b16 %v1317, %v1308
        %v1660 = vpack.c.b16 %v1318, %v1309
        %v1661 = vpack.c.b16 %v1319, %v1310
        %v1662 = vpack.c.b16 %v1320, %v1311
        %v1663 = vpack.c.b16 %v1321, %v1312
        %v1664 = vpack.c.b16 %v1322, %v1313
        %v1665 = vpack.c.b16 %v1323, %v1314
        %v1666 = vpack.c.b16 %v1324, %v1315
        %v1667 = vpack.c.b16 %v1334, %v1325
        %v1668 = vpack.c.b16 %v1335, %v1326
        %v1669 = vpack.c.b16 %v1336, %v1327
        %v1670 = vpack.c.b16 %v1337, %v1328
        %v1671 = vpack.c.b16 %v1338, %v1329
        %v1672 = vpack.c.b16 %v1339, %v1330
        %v1673 = vpack.c.b16 %v1340, %v1331
        %v1674 = vpack.c.b16 %v1341, %v1332
        %v1675 = vpack.c.b16 %v1342, %v1333
        %v1676 = vpack.c.b16 %v1352, %v1343
        %v1677 = vpack.c.b16 %v1353, %v1344
        %v1678 = vpack.c.b16 %v1354, %v1345
        %v1679 = vpack.c.b16 %v1355, %v1346
        %v1680 = vpack.c.b16 %v1356, %v1347
        %v1681 = vpack.c.b16 %v1357, %v1348
        %v1682 = vpack.c.b16 %v1358, %v1349
        %v1683 = vpack.c.b16 %v1359, %v1350
        %v1684 = vpack.c.b16 %v1360, %v1351
        %v1685 = vpack.c.b16 %v1370, %v1361
        %v1686 = vpack.c.b16 %v1371, %v1362
        %v1687 = vpack.c.b16 %v1372, %v1363
        %v1688 = vpack.c.b16 %v1373, %v1364
        %v1689 = vpack.c.b16 %v1374, %v1365
        %v1690 = vpack.c.b16 %v1375, %v1366
        %v1691 = vpack.c.b16 %v1376, %v1367
        %v1692 = vpack.c.b16 %v1377, %v1368
        %v1693 = vpack.c.b16 %v1378, %v1369
        %v1694 = vpack.c.b16 %v1388, %v1379
        %v1695 = vpack.c.b16 %v1389, %v1380
        %v1696 = vpack.c.b16 %v1390, %v1381
        %v1697 = vpack.c.b16 %v1391, %v1382
        %v1698 = vpack.c.b16 %v1392, %v1383
        %v1699 = vpack.c.b16 %v1393, %v1384
        %v1700 = vpack.c.b16 %v1394, %v1385
        %v1701 = vpack.c.b16 %v1395, %v1386
        %v1702 = vpack.c.b16 %v1396, %v1387
        %v1703 = vpack.c.b16 %v1406, %v1397
        %v1704 = vpack.c.b16 %v1407, %v1398
        %v1705 = vpack.c.b16 %v1408, %v1399
        %v1706 = vpack.c.b16 %v1409, %v1400
        %v1707 = vpack.c.b16 %v1410, %v1401
        %v1708 = vpack.c.b16 %v1411, %v1402
        %v1709 = vpack.c.b16 %v1412, %v1403
        %v1710 = vpack.c.b16 %v1413, %v1404
        %v1711 = vpack.c.b16 %v1414, %v1405
        %v1712 = vpack.c.b16 %v1424, %v1415
        %v1713 = vpack.c.b16 %v1425, %v1416
        %v1714 = vpack.c.b16 %v1426, %v1417
        %v1715 = vpack.c.b16 %v1427, %v1418
        %v1716 = vpack.c.b16 %v1428, %v1419
        %v1717 = vpack.c.b16 %v1429, %v1420
        %v1718 = vpack.c.b16 %v1430, %v1421
        %v1719 = vpack.c.b16 %v1431, %v1422
        %v1720 = vpack.c.b16 %v1432, %v1423
        %v1721 = vpack.c.b16 %v1442, %v1433
        %v1722 = vpack.c.b16 %v1443, %v1434
        %v1723 = vpack.c.b16 %v1444, %v1435
        %v1724 = vpack.c.b16 %v1445, %v1436
        %v1725 = vpack.c.b16 %v1446, %v1437
        %v1726 = vpack.c.b16 %v1447, %v1438
        %v1727 = vpack.c.b16 %v1448, %v1439
        %v1728 = vpack.c.b16 %v1449, %v1440
        %v1729 = vpack.c.b16 %v1450, %v1441
        %v1730 = vpack.c.b16 %v1460, %v1451
        %v1731 = vpack.c.b16 %v1461, %v1452
        %v1732 = vpack.c.b16 %v1462, %v1453
        %v1733 = vpack.c.b16 %v1463, %v1454
        %v1734 = vpack.c.b16 %v1464, %v1455
        %v1735 = vpack.c.b16 %v1465, %v1456
        %v1736 = vpack.c.b16 %v1466, %v1457
        %v1737 = vpack.c.b16 %v1467, %v1458
        %v1738 = vpack.c.b16 %v1468, %v1459
        %v1739 = vpack.c.b16 %v1478, %v1469
        %v1740 = vpack.c.b16 %v1479, %v1470
        %v1741 = vpack.c.b16 %v1480, %v1471
        %v1742 = vpack.c.b16 %v1481, %v1472
        %v1743 = vpack.c.b16 %v1482, %v1473
        %v1744 = vpack.c.b16 %v1483, %v1474
        %v1745 = vpack.c.b16 %v1484, %v1475
        %v1746 = vpack.c.b16 %v1485, %v1476
        %v1747 = vpack.c.b16 %v1486, %v1477
        %v1748 = vpack.c.b16 %v1496, %v1487
        %v1749 = vpack.c.b16 %v1497, %v1488
        %v1750 = vpack.c.b16 %v1498, %v1489
        %v1751 = vpack.c.b16 %v1499, %v1490
        %v1752 = vpack.c.b16 %v1500, %v1491
        %v1753 = vpack.c.b16 %v1501, %v1492
        %v1754 = vpack.c.b16 %v1502, %v1493
        %v1755 = vpack.c.b16 %v1503, %v1494
        %v1756 = vpack.c.b16 %v1504, %v1495
        %v1757 = vpack.c.b16 %v1514, %v1505
        %v1758 = vpack.c.b16 %v1515, %v1506
        %v1759 = vpack.c.b16 %v1516, %v1507
        %v1760 = vpack.c.b16 %v1517, %v1508
        %v1761 = vpack.c.b16 %v1518, %v1509
        %v1762 = vpack.c.b16 %v1519, %v1510
        %v1763 = vpack.c.b16 %v1520, %v1511
        %v1764 = vpack.c.b16 %v1521, %v1512
        %v1765 = vpack.c.b16 %v1522, %v1513
        %v1766 = vpack.c.b16 %v1532, %v1523
        %v1767 = vpack.c.b16 %v1533, %v1524
        %v1768 = vpack.c.b16 %v1534, %v1525
        %v1769 = vpack.c.b16 %v1535, %v1526
        %v1770 = vpack.c.b16 %v1536, %v1527
        %v1771 = vpack.c.b16 %v1537, %v1528
        %v1772 = vpack.c.b16 %v1538, %v1529
        %v1773 = vpack.c.b16 %v1539, %v1530
        %v1774 = vpack.c.b16 %v1540, %v1531
        %v1775 = vpack.c.b16 %v1550, %v1541
        %v1776 = vpack.c.b16 %v1551, %v1542
        %v1777 = vpack.c.b16 %v1552, %v1543
        %v1778 = vpack.c.b16 %v1553, %v1544
        %v1779 = vpack.c.b16 %v1554, %v1545
        %v1780 = vpack.c.b16 %v1555, %v1546
        %v1781 = vpack.c.b16 %v1556, %v1547
        %v1782 = vpack.c.b16 %v1557, %v1548
        %v1783 = vpack.c.b16 %v1558, %v1549
        %v1784 = vpack.c.b16 %v1568, %v1559
        %v1785 = vpack.c.b16 %v1569, %v1560
        %v1786 = vpack.c.b16 %v1570, %v1561
        %v1787 = vpack.c.b16 %v1571, %v1562
        %v1788 = vpack.c.b16 %v1572, %v1563
        %v1789 = vpack.c.b16 %v1573, %v1564
        %v1790 = vpack.c.b16 %v1574, %v1565
        %v1791 = vpack.c.b16 %v1575, %v1566
        %v1792 = vpack.c.b16 %v1576, %v1567
        %2009 = vmatpush.bf16.msra.mxu0 %v1640
        %2010 = vmatpush.bf16.msra.mxu0 %v1631
        %2011 = vmatpush.bf16.msra.mxu0 %v1622
        %2012 = vmatpush.bf16.msra.mxu0 %v1613
        %2013 = vmatpush.bf16.msra.mxu0 %v1604
        %2014 = vmatpush.bf16.msra.mxu0 %v1595
        %2015 = vmatpush.bf16.msra.mxu0 %v1586
        %2016 = vmatpush.bf16.msra.mxu0 %v1577
        %2017 = vmatmul.bf16.gmra.mxu0 %v662
        %v2018 = vpop.f32.mrf.mxu0
        %v2019 = vadd.f32 0.0, %v2018
        %v2020 = vpop.f32.mrf.mxu0
        %2021 = vdwg.mxu0
        %2022 = vmatpush.bf16.msra.mxu0 %v1712
        %2023 = vmatpush.bf16.msra.mxu0 %v1703
        %2024 = vmatpush.bf16.msra.mxu0 %v1694
        %2025 = vmatpush.bf16.msra.mxu0 %v1685
        %2026 = vmatpush.bf16.msra.mxu0 %v1676
        %2027 = vmatpush.bf16.msra.mxu0 %v1667
        %2028 = vmatpush.bf16.msra.mxu0 %v1658
        %2029 = vmatpush.bf16.msra.mxu0 %v1649
        %2030 = vmatmul.bf16.gmra.mxu0 %v663
        %v2031 = vpop.f32.mrf.mxu0
        %v2032 = vadd.f32 %v2019, %v2031
        %v2033 = vpop.f32.mrf.mxu0
        %2034 = vdwg.mxu0
        %2035 = vmatpush.bf16.msra.mxu0 %v1784
        %2036 = vmatpush.bf16.msra.mxu0 %v1775
        %2037 = vmatpush.bf16.msra.mxu0 %v1766
        %2038 = vmatpush.bf16.msra.mxu0 %v1757
        %2039 = vmatpush.bf16.msra.mxu0 %v1748
        %2040 = vmatpush.bf16.msra.mxu0 %v1739
        %2041 = vmatpush.bf16.msra.mxu0 %v1730
        %2042 = vmatpush.bf16.msra.mxu0 %v1721
        %2043 = vmatmul.bf16.gmra.mxu0 %v664
        %v2044 = vpop.f32.mrf.mxu0
        %v2045 = vadd.f32 %v2032, %v2044
        %v2046 = vpop.f32.mrf.mxu0
        %2047 = vdwg.mxu0
        %2048 = vmatpush.bf16.msra.mxu0 %v1641
        %2049 = vmatpush.bf16.msra.mxu0 %v1632
        %2050 = vmatpush.bf16.msra.mxu0 %v1623
        %2051 = vmatpush.bf16.msra.mxu0 %v1614
        %2052 = vmatpush.bf16.msra.mxu0 %v1605
        %2053 = vmatpush.bf16.msra.mxu0 %v1596
        %2054 = vmatpush.bf16.msra.mxu0 %v1587
        %2055 = vmatpush.bf16.msra.mxu0 %v1578
        %2056 = vmatmul.bf16.gmra.mxu0 %v662
        %v2057 = vpop.f32.mrf.mxu0
        %v2058 = vadd.f32 0.0, %v2057
        %v2059 = vpop.f32.mrf.mxu0
        %2060 = vdwg.mxu0
        %2061 = vmatpush.bf16.msra.mxu0 %v1713
        %2062 = vmatpush.bf16.msra.mxu0 %v1704
        %2063 = vmatpush.bf16.msra.mxu0 %v1695
        %2064 = vmatpush.bf16.msra.mxu0 %v1686
        %2065 = vmatpush.bf16.msra.mxu0 %v1677
        %2066 = vmatpush.bf16.msra.mxu0 %v1668
        %2067 = vmatpush.bf16.msra.mxu0 %v1659
        %2068 = vmatpush.bf16.msra.mxu0 %v1650
        %2069 = vmatmul.bf16.gmra.mxu0 %v663
        %v2070 = vpop.f32.mrf.mxu0
        %v2071 = vadd.f32 %v2058, %v2070
        %v2072 = vpop.f32.mrf.mxu0
        %2073 = vdwg.mxu0
        %2074 = vmatpush.bf16.msra.mxu0 %v1785
        %2075 = vmatpush.bf16.msra.mxu0 %v1776
        %2076 = vmatpush.bf16.msra.mxu0 %v1767
        %2077 = vmatpush.bf16.msra.mxu0 %v1758
        %2078 = vmatpush.bf16.msra.mxu0 %v1749
        %2079 = vmatpush.bf16.msra.mxu0 %v1740
        %2080 = vmatpush.bf16.msra.mxu0 %v1731
        %2081 = vmatpush.bf16.msra.mxu0 %v1722
        %2082 = vmatmul.bf16.gmra.mxu0 %v664
        %v2083 = vpop.f32.mrf.mxu0
        %v2084 = vadd.f32 %v2071, %v2083
        %v2085 = vpop.f32.mrf.mxu0
        %2086 = vdwg.mxu0
        %2087 = vmatpush.bf16.msra.mxu0 %v1642
        %2088 = vmatpush.bf16.msra.mxu0 %v1633
        %2089 = vmatpush.bf16.msra.mxu0 %v1624
        %2090 = vmatpush.bf16.msra.mxu0 %v1615
        %2091 = vmatpush.bf16.msra.mxu0 %v1606
        %2092 = vmatpush.bf16.msra.mxu0 %v1597
        %2093 = vmatpush.bf16.msra.mxu0 %v1588
        %2094 = vmatpush.bf16.msra.mxu0 %v1579
        %2095 = vmatmul.bf16.gmra.mxu0 %v662
        %v2096 = vpop.f32.mrf.mxu0
        %v2097 = vadd.f32 0.0, %v2096
        %v2098 = vpop.f32.mrf.mxu0
        %2099 = vdwg.mxu0
        %2100 = vmatpush.bf16.msra.mxu0 %v1714
        %2101 = vmatpush.bf16.msra.mxu0 %v1705
        %2102 = vmatpush.bf16.msra.mxu0 %v1696
        %2103 = vmatpush.bf16.msra.mxu0 %v1687
        %2104 = vmatpush.bf16.msra.mxu0 %v1678
        %2105 = vmatpush.bf16.msra.mxu0 %v1669
        %2106 = vmatpush.bf16.msra.mxu0 %v1660
        %2107 = vmatpush.bf16.msra.mxu0 %v1651
        %2108 = vmatmul.bf16.gmra.mxu0 %v663
        %v2109 = vpop.f32.mrf.mxu0
        %v2110 = vadd.f32 %v2097, %v2109
        %v2111 = vpop.f32.mrf.mxu0
        %2112 = vdwg.mxu0
        %2113 = vmatpush.bf16.msra.mxu0 %v1786
        %2114 = vmatpush.bf16.msra.mxu0 %v1777
        %2115 = vmatpush.bf16.msra.mxu0 %v1768
        %2116 = vmatpush.bf16.msra.mxu0 %v1759
        %2117 = vmatpush.bf16.msra.mxu0 %v1750
        %2118 = vmatpush.bf16.msra.mxu0 %v1741
        %2119 = vmatpush.bf16.msra.mxu0 %v1732
        %2120 = vmatpush.bf16.msra.mxu0 %v1723
        %2121 = vmatmul.bf16.gmra.mxu0 %v664
        %v2122 = vpop.f32.mrf.mxu0
        %v2123 = vadd.f32 %v2110, %v2122
        %v2124 = vpop.f32.mrf.mxu0
        %2125 = vdwg.mxu0
        %2126 = vmatpush.bf16.msra.mxu0 %v1643
        %2127 = vmatpush.bf16.msra.mxu0 %v1634
        %2128 = vmatpush.bf16.msra.mxu0 %v1625
        %2129 = vmatpush.bf16.msra.mxu0 %v1616
        %2130 = vmatpush.bf16.msra.mxu0 %v1607
        %2131 = vmatpush.bf16.msra.mxu0 %v1598
        %2132 = vmatpush.bf16.msra.mxu0 %v1589
        %2133 = vmatpush.bf16.msra.mxu0 %v1580
        %2134 = vmatmul.bf16.gmra.mxu0 %v662
        %v2135 = vpop.f32.mrf.mxu0
        %v2136 = vadd.f32 0.0, %v2135
        %v2137 = vpop.f32.mrf.mxu0
        %2138 = vdwg.mxu0
        %2139 = vmatpush.bf16.msra.mxu0 %v1715
        %2140 = vmatpush.bf16.msra.mxu0 %v1706
        %2141 = vmatpush.bf16.msra.mxu0 %v1697
        %2142 = vmatpush.bf16.msra.mxu0 %v1688
        %2143 = vmatpush.bf16.msra.mxu0 %v1679
        %2144 = vmatpush.bf16.msra.mxu0 %v1670
        %2145 = vmatpush.bf16.msra.mxu0 %v1661
        %2146 = vmatpush.bf16.msra.mxu0 %v1652
        %2147 = vmatmul.bf16.gmra.mxu0 %v663
        %v2148 = vpop.f32.mrf.mxu0
        %v2149 = vadd.f32 %v2136, %v2148
        %v2150 = vpop.f32.mrf.mxu0
        %2151 = vdwg.mxu0
        %2152 = vmatpush.bf16.msra.mxu0 %v1787
        %2153 = vmatpush.bf16.msra.mxu0 %v1778
        %2154 = vmatpush.bf16.msra.mxu0 %v1769
        %2155 = vmatpush.bf16.msra.mxu0 %v1760
        %2156 = vmatpush.bf16.msra.mxu0 %v1751
        %2157 = vmatpush.bf16.msra.mxu0 %v1742
        %2158 = vmatpush.bf16.msra.mxu0 %v1733
        %2159 = vmatpush.bf16.msra.mxu0 %v1724
        %2160 = vmatmul.bf16.gmra.mxu0 %v664
        %v2161 = vpop.f32.mrf.mxu0
        %v2162 = vadd.f32 %v2149, %v2161
        %v2163 = vpop.f32.mrf.mxu0
        %2164 = vdwg.mxu0
        %2165 = vmatpush.bf16.msra.mxu0 %v1644
        %2166 = vmatpush.bf16.msra.mxu0 %v1635
        %2167 = vmatpush.bf16.msra.mxu0 %v1626
        %2168 = vmatpush.bf16.msra.mxu0 %v1617
        %2169 = vmatpush.bf16.msra.mxu0 %v1608
        %2170 = vmatpush.bf16.msra.mxu0 %v1599
        %2171 = vmatpush.bf16.msra.mxu0 %v1590
        %2172 = vmatpush.bf16.msra.mxu0 %v1581
        %2173 = vmatmul.bf16.gmra.mxu0 %v662
        %v2174 = vpop.f32.mrf.mxu0
        %v2175 = vadd.f32 0.0, %v2174
        %v2176 = vpop.f32.mrf.mxu0
        %2177 = vdwg.mxu0
        %2178 = vmatpush.bf16.msra.mxu0 %v1716
        %2179 = vmatpush.bf16.msra.mxu0 %v1707
        %2180 = vmatpush.bf16.msra.mxu0 %v1698
        %2181 = vmatpush.bf16.msra.mxu0 %v1689
        %2182 = vmatpush.bf16.msra.mxu0 %v1680
        %2183 = vmatpush.bf16.msra.mxu0 %v1671
        %2184 = vmatpush.bf16.msra.mxu0 %v1662
        %2185 = vmatpush.bf16.msra.mxu0 %v1653
        %2186 = vmatmul.bf16.gmra.mxu0 %v663
        %v2187 = vpop.f32.mrf.mxu0
        %v2188 = vadd.f32 %v2175, %v2187
        %v2189 = vpop.f32.mrf.mxu0
        %2190 = vdwg.mxu0
        %2191 = vmatpush.bf16.msra.mxu0 %v1788
        %2192 = vmatpush.bf16.msra.mxu0 %v1779
        %2193 = vmatpush.bf16.msra.mxu0 %v1770
        %2194 = vmatpush.bf16.msra.mxu0 %v1761
        %2195 = vmatpush.bf16.msra.mxu0 %v1752
        %2196 = vmatpush.bf16.msra.mxu0 %v1743
        %2197 = vmatpush.bf16.msra.mxu0 %v1734
        %2198 = vmatpush.bf16.msra.mxu0 %v1725
        %2199 = vmatmul.bf16.gmra.mxu0 %v664
        %v2200 = vpop.f32.mrf.mxu0
        %v2201 = vadd.f32 %v2188, %v2200
        %v2202 = vpop.f32.mrf.mxu0
        %2203 = vdwg.mxu0
        %2204 = vmatpush.bf16.msra.mxu0 %v1645
        %2205 = vmatpush.bf16.msra.mxu0 %v1636
        %2206 = vmatpush.bf16.msra.mxu0 %v1627
        %2207 = vmatpush.bf16.msra.mxu0 %v1618
        %2208 = vmatpush.bf16.msra.mxu0 %v1609
        %2209 = vmatpush.bf16.msra.mxu0 %v1600
        %2210 = vmatpush.bf16.msra.mxu0 %v1591
        %2211 = vmatpush.bf16.msra.mxu0 %v1582
        %2212 = vmatmul.bf16.gmra.mxu0 %v662
        %v2213 = vpop.f32.mrf.mxu0
        %v2214 = vadd.f32 0.0, %v2213
        %v2215 = vpop.f32.mrf.mxu0
        %2216 = vdwg.mxu0
        %2217 = vmatpush.bf16.msra.mxu0 %v1717
        %2218 = vmatpush.bf16.msra.mxu0 %v1708
        %2219 = vmatpush.bf16.msra.mxu0 %v1699
        %2220 = vmatpush.bf16.msra.mxu0 %v1690
        %2221 = vmatpush.bf16.msra.mxu0 %v1681
        %2222 = vmatpush.bf16.msra.mxu0 %v1672
        %2223 = vmatpush.bf16.msra.mxu0 %v1663
        %2224 = vmatpush.bf16.msra.mxu0 %v1654
        %2225 = vmatmul.bf16.gmra.mxu0 %v663
        %v2226 = vpop.f32.mrf.mxu0
        %v2227 = vadd.f32 %v2214, %v2226
        %v2228 = vpop.f32.mrf.mxu0
        %2229 = vdwg.mxu0
        %2230 = vmatpush.bf16.msra.mxu0 %v1789
        %2231 = vmatpush.bf16.msra.mxu0 %v1780
        %2232 = vmatpush.bf16.msra.mxu0 %v1771
        %2233 = vmatpush.bf16.msra.mxu0 %v1762
        %2234 = vmatpush.bf16.msra.mxu0 %v1753
        %2235 = vmatpush.bf16.msra.mxu0 %v1744
        %2236 = vmatpush.bf16.msra.mxu0 %v1735
        %2237 = vmatpush.bf16.msra.mxu0 %v1726
        %2238 = vmatmul.bf16.gmra.mxu0 %v664
        %v2239 = vpop.f32.mrf.mxu0
        %v2240 = vadd.f32 %v2227, %v2239
        %v2241 = vpop.f32.mrf.mxu0
        %2242 = vdwg.mxu0
        %2243 = vmatpush.bf16.msra.mxu0 %v1646
        %2244 = vmatpush.bf16.msra.mxu0 %v1637
        %2245 = vmatpush.bf16.msra.mxu0 %v1628
        %2246 = vmatpush.bf16.msra.mxu0 %v1619
        %2247 = vmatpush.bf16.msra.mxu0 %v1610
        %2248 = vmatpush.bf16.msra.mxu0 %v1601
        %2249 = vmatpush.bf16.msra.mxu0 %v1592
        %2250 = vmatpush.bf16.msra.mxu0 %v1583
        %2251 = vmatmul.bf16.gmra.mxu0 %v662
        %v2252 = vpop.f32.mrf.mxu0
        %v2253 = vadd.f32 0.0, %v2252
        %v2254 = vpop.f32.mrf.mxu0
        %2255 = vdwg.mxu0
        %2256 = vmatpush.bf16.msra.mxu0 %v1718
        %2257 = vmatpush.bf16.msra.mxu0 %v1709
        %2258 = vmatpush.bf16.msra.mxu0 %v1700
        %2259 = vmatpush.bf16.msra.mxu0 %v1691
        %2260 = vmatpush.bf16.msra.mxu0 %v1682
        %2261 = vmatpush.bf16.msra.mxu0 %v1673
        %2262 = vmatpush.bf16.msra.mxu0 %v1664
        %2263 = vmatpush.bf16.msra.mxu0 %v1655
        %2264 = vmatmul.bf16.gmra.mxu0 %v663
        %v2265 = vpop.f32.mrf.mxu0
        %v2266 = vadd.f32 %v2253, %v2265
        %v2267 = vpop.f32.mrf.mxu0
        %2268 = vdwg.mxu0
        %2269 = vmatpush.bf16.msra.mxu0 %v1790
        %2270 = vmatpush.bf16.msra.mxu0 %v1781
        %2271 = vmatpush.bf16.msra.mxu0 %v1772
        %2272 = vmatpush.bf16.msra.mxu0 %v1763
        %2273 = vmatpush.bf16.msra.mxu0 %v1754
        %2274 = vmatpush.bf16.msra.mxu0 %v1745
        %2275 = vmatpush.bf16.msra.mxu0 %v1736
        %2276 = vmatpush.bf16.msra.mxu0 %v1727
        %2277 = vmatmul.bf16.gmra.mxu0 %v664
        %v2278 = vpop.f32.mrf.mxu0
        %v2279 = vadd.f32 %v2266, %v2278
        %v2280 = vpop.f32.mrf.mxu0
        %2281 = vdwg.mxu0
        %2282 = vmatpush.bf16.msra.mxu0 %v1647
        %2283 = vmatpush.bf16.msra.mxu0 %v1638
        %2284 = vmatpush.bf16.msra.mxu0 %v1629
        %2285 = vmatpush.bf16.msra.mxu0 %v1620
        %2286 = vmatpush.bf16.msra.mxu0 %v1611
        %2287 = vmatpush.bf16.msra.mxu0 %v1602
        %2288 = vmatpush.bf16.msra.mxu0 %v1593
        %2289 = vmatpush.bf16.msra.mxu0 %v1584
        %2290 = vmatmul.bf16.gmra.mxu0 %v662
        %v2291 = vpop.f32.mrf.mxu0
        %v2292 = vadd.f32 0.0, %v2291
        %v2293 = vpop.f32.mrf.mxu0
        %2294 = vdwg.mxu0
        %2295 = vmatpush.bf16.msra.mxu0 %v1719
        %2296 = vmatpush.bf16.msra.mxu0 %v1710
        %2297 = vmatpush.bf16.msra.mxu0 %v1701
        %2298 = vmatpush.bf16.msra.mxu0 %v1692
        %2299 = vmatpush.bf16.msra.mxu0 %v1683
        %2300 = vmatpush.bf16.msra.mxu0 %v1674
        %2301 = vmatpush.bf16.msra.mxu0 %v1665
        %2302 = vmatpush.bf16.msra.mxu0 %v1656
        %2303 = vmatmul.bf16.gmra.mxu0 %v663
        %v2304 = vpop.f32.mrf.mxu0
        %v2305 = vadd.f32 %v2292, %v2304
        %v2306 = vpop.f32.mrf.mxu0
        %2307 = vdwg.mxu0
        %2308 = vmatpush.bf16.msra.mxu0 %v1791
        %2309 = vmatpush.bf16.msra.mxu0 %v1782
        %2310 = vmatpush.bf16.msra.mxu0 %v1773
        %2311 = vmatpush.bf16.msra.mxu0 %v1764
        %2312 = vmatpush.bf16.msra.mxu0 %v1755
        %2313 = vmatpush.bf16.msra.mxu0 %v1746
        %2314 = vmatpush.bf16.msra.mxu0 %v1737
        %2315 = vmatpush.bf16.msra.mxu0 %v1728
        %2316 = vmatmul.bf16.gmra.mxu0 %v664
        %v2317 = vpop.f32.mrf.mxu0
        %v2318 = vadd.f32 %v2305, %v2317
        %v2319 = vpop.f32.mrf.mxu0
        %2320 = vdwg.mxu0
        %2321 = vmatpush.bf16.msra.mxu0 %v1648
        %2322 = vmatpush.bf16.msra.mxu0 %v1639
        %2323 = vmatpush.bf16.msra.mxu0 %v1630
        %2324 = vmatpush.bf16.msra.mxu0 %v1621
        %2325 = vmatpush.bf16.msra.mxu0 %v1612
        %2326 = vmatpush.bf16.msra.mxu0 %v1603
        %2327 = vmatpush.bf16.msra.mxu0 %v1594
        %2328 = vmatpush.bf16.msra.mxu0 %v1585
        %2329 = vmatmul.bf16.gmra.mxu0 %v662
        %v2330 = vpop.f32.mrf.mxu0
        %v2331 = vadd.f32 0.0, %v2330
        %v2332 = vpop.f32.mrf.mxu0
        %2333 = vdwg.mxu0
        %2334 = vmatpush.bf16.msra.mxu0 %v1720
        %2335 = vmatpush.bf16.msra.mxu0 %v1711
        %2336 = vmatpush.bf16.msra.mxu0 %v1702
        %2337 = vmatpush.bf16.msra.mxu0 %v1693
        %2338 = vmatpush.bf16.msra.mxu0 %v1684
        %2339 = vmatpush.bf16.msra.mxu0 %v1675
        %2340 = vmatpush.bf16.msra.mxu0 %v1666
        %2341 = vmatpush.bf16.msra.mxu0 %v1657
        %2342 = vmatmul.bf16.gmra.mxu0 %v663
        %v2343 = vpop.f32.mrf.mxu0
        %v2344 = vadd.f32 %v2331, %v2343
        %v2345 = vpop.f32.mrf.mxu0
        %2346 = vdwg.mxu0
        %2347 = vmatpush.bf16.msra.mxu0 %v1792
        %2348 = vmatpush.bf16.msra.mxu0 %v1783
        %2349 = vmatpush.bf16.msra.mxu0 %v1774
        %2350 = vmatpush.bf16.msra.mxu0 %v1765
        %2351 = vmatpush.bf16.msra.mxu0 %v1756
        %2352 = vmatpush.bf16.msra.mxu0 %v1747
        %2353 = vmatpush.bf16.msra.mxu0 %v1738
        %2354 = vmatpush.bf16.msra.mxu0 %v1729
        %2355 = vmatmul.bf16.gmra.mxu0 %v664
        %v2356 = vpop.f32.mrf.mxu0
        %v2357 = vadd.f32 %v2344, %v2356
        %v2358 = vpop.f32.mrf.mxu0
        %2359 = vdwg.mxu0
        %v2368 = vrot.slane %v2084, 7
        %v2369 = vrot.slane %v2123, 6
        %v2370 = vrot.slane %v2162, 5
        %v2371 = vrot.slane %v2201, 4
        %v2372 = vrot.slane %v2240, 3
        %v2373 = vrot.slane %v2279, 2
        %v2374 = vrot.slane %v2318, 1
        %vm2375 = vcmask 1040384
        %v2376 = vsel %vm2375, %v2045, %v2368
        %vm2377 = vcmask 1042434
        %v2378 = vsel %vm2377, %v2369, %v2370
        %vm2379 = vcmask 1041408
        %v2380 = vsel %vm2379, %v2376, %v2378
        %vm2381 = vcmask 1044484
        %v2382 = vsel %vm2381, %v2371, %v2372
        %vm2383 = vcmask 1046534
        %v2384 = vsel %vm2383, %v2373, %v2374
        %vm2385 = vcmask 1045508
        %v2386 = vsel %vm2385, %v2382, %v2384
        %vm2387 = vcmask 1043456
        %v2388 = vsel %vm2387, %v2380, %v2386
        %v2390 = vadd.f32 %v660, %v2388
        %v2391 = vadd.f32 %v661, %v2357
        %2392 = vst [vmem:[#allocation2] sm:$0xff] %v2390
        %v2393 = vlaneseq
        %vm2394 = vcmp.ge.s32.totalorder %v2393, 0
        %vm2395 = vcmp.lt.s32.totalorder %v2393, 128
        %vm2396 = vmand %vm2394, %vm2395
        %2397 = vst.msk [vmem:[#allocation2 + $0x8] sm:$0x1] %vm2396, %v2391
        %p2398 = scmp.eq.s32.totalorder %s32, 2
        // Predicated region
        $region77: #{tpu_custom_call.1} parent=47 // pred_check
          %p2399 = pneg %p2398
        $region78: #{tpu_custom_call.1} parent=47 // pred_check_branch
          %2401 = sbr.rel (%p2399) target = $region80
        $region79: #{tpu_custom_call.1} parent=47 // pred_region
          %v2402 = vld [vmem:[#allocation2] sm:$0xff]
          %v2403 = vld [vmem:[#allocation2 + $0x8] sm:$0x1]
          %v2404 = vld [vmem:[#allocation11] sm:$0xff]
          %v2405 = vld [vmem:[#allocation11 + $0x8] sm:$0x1]
          %v2406 = vadd.f32 %v2402, %v2404
          %v2407 = vadd.f32 %v2403, %v2405
          %v2408 = vmul.f32 %v2406, 0.01
          %v2409 = vmul.f32 %v2407, 0.01
          %v2410 = vmax.f32 %v2406, %v2408
          %v2411 = vmax.f32 %v2407, %v2409
          %v2414 = vperm.slane %v2410, 0
          %v2415 = vperm.slane %v2410, 1
          %v2416 = vperm.slane %v2410, 2
          %v2417 = vperm.slane %v2410, 3
          %v2418 = vperm.slane %v2410, 4
          %v2419 = vperm.slane %v2410, 5
          %v2420 = vperm.slane %v2410, 6
          %v2421 = vperm.slane %v2410, 7
          %v2422 = vperm.slane %v2411, 0
          %v2432 = vpack.c.bf16 %v2414, %v2414
          %v2433 = vpack.c.bf16 %v2415, %v2415
          %v2434 = vpack.c.bf16 %v2416, %v2416
          %v2435 = vpack.c.bf16 %v2417, %v2417
          %v2436 = vpack.c.bf16 %v2418, %v2418
          %v2437 = vpack.c.bf16 %v2419, %v2419
          %v2438 = vpack.c.bf16 %v2420, %v2420
          %v2439 = vpack.c.bf16 %v2421, %v2421
          %v2440 = vpack.c.bf16 %v2422, %v2422
          %v2441 = vld [vmem:[%s5] sm:$0xf]
          %v2442 = vld [vmem:[%s5 + $0x4] sm:$0xf]
          %v2443 = vld [vmem:[%s5 + $0x8] sm:$0xf]
          %v2444 = vld [vmem:[%s5 + $0xc] sm:$0xf]
          %v2445 = vld [vmem:[%s5 + $0x10] sm:$0xf]
          %v2446 = vld [vmem:[%s5 + $0x14] sm:$0xf]
          %v2447 = vld [vmem:[%s5 + $0x18] sm:$0xf]
          %v2448 = vld [vmem:[%s5 + $0x1c] sm:$0xf]
          %v2449 = vld [vmem:[%s5 + $0x20] sm:$0xf]
          %v2450 = vld [vmem:[%s5 + $0x24] sm:$0xf]
          %v2451 = vld [vmem:[%s5 + $0x28] sm:$0xf]
          %v2452 = vld [vmem:[%s5 + $0x2c] sm:$0xf]
          %v2453 = vld [vmem:[%s5 + $0x30] sm:$0xf]
          %v2454 = vld [vmem:[%s5 + $0x34] sm:$0xf]
          %v2455 = vld [vmem:[%s5 + $0x38] sm:$0xf]
          %v2456 = vld [vmem:[%s5 + $0x3c] sm:$0xf]
          %v2457 = vld [vmem:[%s5 + $0x40] sm:$0xf]
          %v2458 = vld [vmem:[%s5 + $0x44] sm:$0xf]
          %v2459 = vld [vmem:[%s5 + $0x48] sm:$0xf]
          %v2460 = vld [vmem:[%s5 + $0x4c] sm:$0xf]
          %v2461 = vld [vmem:[%s5 + $0x50] sm:$0xf]
          %v2462 = vld [vmem:[%s5 + $0x54] sm:$0xf]
          %v2463 = vld [vmem:[%s5 + $0x58] sm:$0xf]
          %v2464 = vld [vmem:[%s5 + $0x5c] sm:$0xf]
          %v2465 = vld [vmem:[%s5 + $0x60] sm:$0xf]
          %v2466 = vld [vmem:[%s5 + $0x64] sm:$0xf]
          %v2467 = vld [vmem:[%s5 + $0x68] sm:$0xf]
          %v2468 = vld [vmem:[%s5 + $0x6c] sm:$0xf]
          %v2469 = vld [vmem:[%s5 + $0x70] sm:$0xf]
          %v2470 = vld [vmem:[%s5 + $0x74] sm:$0xf]
          %v2471 = vld [vmem:[%s5 + $0x78] sm:$0xf]
          %v2472 = vld [vmem:[%s5 + $0x7c] sm:$0xf]
          %v2473 = vld [vmem:[%s5 + $0x80] sm:$0xf]
          %v2474 = vld [vmem:[%s5 + $0x84] sm:$0xf]
          %v2475 = vld [vmem:[%s5 + $0x88] sm:$0xf]
          %v2476 = vld [vmem:[%s5 + $0x8c] sm:$0xf]
          %v2477 = vld [vmem:[%s5 + $0x90] sm:$0xf]
          %v2478 = vld [vmem:[%s5 + $0x94] sm:$0xf]
          %v2479 = vld [vmem:[%s5 + $0x98] sm:$0xf]
          %v2480 = vld [vmem:[%s5 + $0x9c] sm:$0xf]
          %v2481 = vld [vmem:[%s5 + $0xa0] sm:$0xf]
          %v2482 = vld [vmem:[%s5 + $0xa4] sm:$0xf]
          %v2483 = vld [vmem:[%s5 + $0xa8] sm:$0xf]
          %v2484 = vld [vmem:[%s5 + $0xac] sm:$0xf]
          %v2485 = vld [vmem:[%s5 + $0xb0] sm:$0xf]
          %v2486 = vld [vmem:[%s5 + $0xb4] sm:$0xf]
          %v2487 = vld [vmem:[%s5 + $0xb8] sm:$0xf]
          %v2488 = vld [vmem:[%s5 + $0xbc] sm:$0xf]
          %v2489 = vld [vmem:[%s5 + $0xc0] sm:$0xf]
          %v2490 = vld [vmem:[%s5 + $0xc4] sm:$0xf]
          %v2491 = vld [vmem:[%s5 + $0xc8] sm:$0xf]
          %v2492 = vld [vmem:[%s5 + $0xcc] sm:$0xf]
          %v2493 = vld [vmem:[%s5 + $0xd0] sm:$0xf]
          %v2494 = vld [vmem:[%s5 + $0xd4] sm:$0xf]
          %v2495 = vld [vmem:[%s5 + $0xd8] sm:$0xf]
          %v2496 = vld [vmem:[%s5 + $0xdc] sm:$0xf]
          %v2497 = vld [vmem:[%s5 + $0xe0] sm:$0xf]
          %v2498 = vld [vmem:[%s5 + $0xe4] sm:$0xf]
          %v2499 = vld [vmem:[%s5 + $0xe8] sm:$0xf]
          %v2500 = vld [vmem:[%s5 + $0xec] sm:$0xf]
          %v2501 = vld [vmem:[%s5 + $0xf0] sm:$0xf]
          %v2502 = vld [vmem:[%s5 + $0xf4] sm:$0xf]
          %v2503 = vld [vmem:[%s5 + $0xf8] sm:$0xf]
          %v2504 = vld [vmem:[%s5 + $0xfc] sm:$0xf]
          %v2505 = vld [vmem:[%s5 + $0x100] sm:$0xf]
          %v2506 = vld [vmem:[%s5 + $0x104] sm:$0xf]
          %v2507 = vld [vmem:[%s5 + $0x108] sm:$0xf]
          %v2508 = vld [vmem:[%s5 + $0x10c] sm:$0xf]
          %v2509 = vld [vmem:[%s5 + $0x110] sm:$0xf]
          %v2510 = vld [vmem:[%s5 + $0x114] sm:$0xf]
          %v2511 = vld [vmem:[%s5 + $0x118] sm:$0xf]
          %v2512 = vld [vmem:[%s5 + $0x11c] sm:$0xf]
          %v2513 = vld [vmem:[%s5 + $0x120] sm:$0xf]
          %v2514 = vld [vmem:[%s5 + $0x124] sm:$0xf]
          %v2515 = vld [vmem:[%s5 + $0x128] sm:$0xf]
          %v2516 = vld [vmem:[%s5 + $0x12c] sm:$0xf]
          %v2517 = vld [vmem:[%s5 + $0x130] sm:$0xf]
          %v2518 = vld [vmem:[%s5 + $0x134] sm:$0xf]
          %v2519 = vld [vmem:[%s5 + $0x138] sm:$0xf]
          %v2520 = vld [vmem:[%s5 + $0x13c] sm:$0xf]
          %v2521 = vld [vmem:[%s5 + $0x140] sm:$0xf]
          %v2522 = vld [vmem:[%s5 + $0x144] sm:$0xf]
          %v2523 = vld [vmem:[%s5 + $0x148] sm:$0xf]
          %v2524 = vld [vmem:[%s5 + $0x14c] sm:$0xf]
          %v2525 = vld [vmem:[%s5 + $0x150] sm:$0xf]
          %v2526 = vld [vmem:[%s5 + $0x154] sm:$0xf]
          %v2527 = vld [vmem:[%s5 + $0x158] sm:$0xf]
          %v2528 = vld [vmem:[%s5 + $0x15c] sm:$0xf]
          %v2529 = vld [vmem:[%s5 + $0x160] sm:$0xf]
          %v2530 = vld [vmem:[%s5 + $0x164] sm:$0xf]
          %v2531 = vld [vmem:[%s5 + $0x168] sm:$0xf]
          %v2532 = vld [vmem:[%s5 + $0x16c] sm:$0xf]
          %v2533 = vld [vmem:[%s5 + $0x170] sm:$0xf]
          %v2534 = vld [vmem:[%s5 + $0x174] sm:$0xf]
          %v2535 = vld [vmem:[%s5 + $0x178] sm:$0xf]
          %v2536 = vld [vmem:[%s5 + $0x17c] sm:$0xf]
          %v2537 = vld [vmem:[%s5 + $0x180] sm:$0xf]
          %v2538 = vld [vmem:[%s5 + $0x184] sm:$0xf]
          %v2539 = vld [vmem:[%s5 + $0x188] sm:$0xf]
          %v2540 = vld [vmem:[%s5 + $0x18c] sm:$0xf]
          %v2541 = vld [vmem:[%s5 + $0x190] sm:$0xf]
          %v2542 = vld [vmem:[%s5 + $0x194] sm:$0xf]
          %v2543 = vld [vmem:[%s5 + $0x198] sm:$0xf]
          %v2544 = vld [vmem:[%s5 + $0x19c] sm:$0xf]
          %v2545 = vld [vmem:[%s5 + $0x1a0] sm:$0xf]
          %v2546 = vld [vmem:[%s5 + $0x1a4] sm:$0xf]
          %v2547 = vld [vmem:[%s5 + $0x1a8] sm:$0xf]
          %v2548 = vld [vmem:[%s5 + $0x1ac] sm:$0xf]
          %v2549 = vld [vmem:[%s5 + $0x1b0] sm:$0xf]
          %v2550 = vld [vmem:[%s5 + $0x1b4] sm:$0xf]
          %v2551 = vld [vmem:[%s5 + $0x1b8] sm:$0xf]
          %v2552 = vld [vmem:[%s5 + $0x1bc] sm:$0xf]
          %v2553 = vld [vmem:[%s5 + $0x1c0] sm:$0xf]
          %v2554 = vld [vmem:[%s5 + $0x1c4] sm:$0xf]
          %v2555 = vld [vmem:[%s5 + $0x1c8] sm:$0xf]
          %v2556 = vld [vmem:[%s5 + $0x1cc] sm:$0xf]
          %v2557 = vld [vmem:[%s5 + $0x1d0] sm:$0xf]
          %v2558 = vld [vmem:[%s5 + $0x1d4] sm:$0xf]
          %v2559 = vld [vmem:[%s5 + $0x1d8] sm:$0xf]
          %v2560 = vld [vmem:[%s5 + $0x1dc] sm:$0xf]
          %v2561 = vld [vmem:[%s5 + $0x1e0] sm:$0xf]
          %v2562 = vld [vmem:[%s5 + $0x1e4] sm:$0xf]
          %v2563 = vld [vmem:[%s5 + $0x1e8] sm:$0xf]
          %v2564 = vld [vmem:[%s5 + $0x1ec] sm:$0xf]
          %v2565 = vld [vmem:[%s5 + $0x1f0] sm:$0xf]
          %v2566 = vld [vmem:[%s5 + $0x1f4] sm:$0xf]
          %v2567 = vld [vmem:[%s5 + $0x1f8] sm:$0xf]
          %v2568 = vld [vmem:[%s5 + $0x1fc] sm:$0xf]
          %v2569 = vld [vmem:[%s5 + $0x200] sm:$0xf]
          %v2570 = vld [vmem:[%s5 + $0x204] sm:$0xf]
          %v2571 = vld [vmem:[%s5 + $0x208] sm:$0xf]
          %v2572 = vld [vmem:[%s5 + $0x20c] sm:$0xf]
          %v2573 = vld [vmem:[%s5 + $0x210] sm:$0xf]
          %v2574 = vld [vmem:[%s5 + $0x214] sm:$0xf]
          %v2575 = vld [vmem:[%s5 + $0x218] sm:$0xf]
          %v2576 = vld [vmem:[%s5 + $0x21c] sm:$0xf]
          %v2577 = vld [vmem:[%s5 + $0x220] sm:$0xf]
          %v2578 = vld [vmem:[%s5 + $0x224] sm:$0xf]
          %v2579 = vld [vmem:[%s5 + $0x228] sm:$0xf]
          %v2580 = vld [vmem:[%s5 + $0x22c] sm:$0xf]
          %v2581 = vld [vmem:[%s5 + $0x230] sm:$0xf]
          %v2582 = vld [vmem:[%s5 + $0x234] sm:$0xf]
          %v2583 = vld [vmem:[%s5 + $0x238] sm:$0xf]
          %v2584 = vld [vmem:[%s5 + $0x23c] sm:$0xf]
          %v2585 = vld [vmem:[#allocation12] sm:$0x1]
          %v2730 = vunpack.c.l.b16 %v2441
          %v2731 = vunpack.c.l.b16 %v2442
          %v2732 = vunpack.c.l.b16 %v2443
          %v2733 = vunpack.c.l.b16 %v2444
          %v2734 = vunpack.c.l.b16 %v2445
          %v2735 = vunpack.c.l.b16 %v2446
          %v2736 = vunpack.c.l.b16 %v2447
          %v2737 = vunpack.c.l.b16 %v2448
          %v2738 = vunpack.c.l.b16 %v2449
          %v2739 = vunpack.c.l.b16 %v2450
          %v2740 = vunpack.c.l.b16 %v2451
          %v2741 = vunpack.c.l.b16 %v2452
          %v2742 = vunpack.c.l.b16 %v2453
          %v2743 = vunpack.c.l.b16 %v2454
          %v2744 = vunpack.c.l.b16 %v2455
          %v2745 = vunpack.c.l.b16 %v2456
          %v2746 = vunpack.c.l.b16 %v2457
          %v2747 = vunpack.c.l.b16 %v2458
          %v2748 = vunpack.c.l.b16 %v2459
          %v2749 = vunpack.c.l.b16 %v2460
          %v2750 = vunpack.c.l.b16 %v2461
          %v2751 = vunpack.c.l.b16 %v2462
          %v2752 = vunpack.c.l.b16 %v2463
          %v2753 = vunpack.c.l.b16 %v2464
          %v2754 = vunpack.c.l.b16 %v2465
          %v2755 = vunpack.c.l.b16 %v2466
          %v2756 = vunpack.c.l.b16 %v2467
          %v2757 = vunpack.c.l.b16 %v2468
          %v2758 = vunpack.c.l.b16 %v2469
          %v2759 = vunpack.c.l.b16 %v2470
          %v2760 = vunpack.c.l.b16 %v2471
          %v2761 = vunpack.c.l.b16 %v2472
          %v2762 = vunpack.c.l.b16 %v2473
          %v2763 = vunpack.c.l.b16 %v2474
          %v2764 = vunpack.c.l.b16 %v2475
          %v2765 = vunpack.c.l.b16 %v2476
          %v2766 = vunpack.c.l.b16 %v2477
          %v2767 = vunpack.c.l.b16 %v2478
          %v2768 = vunpack.c.l.b16 %v2479
          %v2769 = vunpack.c.l.b16 %v2480
          %v2770 = vunpack.c.l.b16 %v2481
          %v2771 = vunpack.c.l.b16 %v2482
          %v2772 = vunpack.c.l.b16 %v2483
          %v2773 = vunpack.c.l.b16 %v2484
          %v2774 = vunpack.c.l.b16 %v2485
          %v2775 = vunpack.c.l.b16 %v2486
          %v2776 = vunpack.c.l.b16 %v2487
          %v2777 = vunpack.c.l.b16 %v2488
          %v2778 = vunpack.c.l.b16 %v2489
          %v2779 = vunpack.c.l.b16 %v2490
          %v2780 = vunpack.c.l.b16 %v2491
          %v2781 = vunpack.c.l.b16 %v2492
          %v2782 = vunpack.c.l.b16 %v2493
          %v2783 = vunpack.c.l.b16 %v2494
          %v2784 = vunpack.c.l.b16 %v2495
          %v2785 = vunpack.c.l.b16 %v2496
          %v2786 = vunpack.c.l.b16 %v2497
          %v2787 = vunpack.c.l.b16 %v2498
          %v2788 = vunpack.c.l.b16 %v2499
          %v2789 = vunpack.c.l.b16 %v2500
          %v2790 = vunpack.c.l.b16 %v2501
          %v2791 = vunpack.c.l.b16 %v2502
          %v2792 = vunpack.c.l.b16 %v2503
          %v2793 = vunpack.c.l.b16 %v2504
          %v2794 = vunpack.c.l.b16 %v2505
          %v2795 = vunpack.c.l.b16 %v2506
          %v2796 = vunpack.c.l.b16 %v2507
          %v2797 = vunpack.c.l.b16 %v2508
          %v2798 = vunpack.c.l.b16 %v2509
          %v2799 = vunpack.c.l.b16 %v2510
          %v2800 = vunpack.c.l.b16 %v2511
          %v2801 = vunpack.c.l.b16 %v2512
          %v2802 = vunpack.c.l.b16 %v2513
          %v2803 = vunpack.c.l.b16 %v2514
          %v2804 = vunpack.c.l.b16 %v2515
          %v2805 = vunpack.c.l.b16 %v2516
          %v2806 = vunpack.c.l.b16 %v2517
          %v2807 = vunpack.c.l.b16 %v2518
          %v2808 = vunpack.c.l.b16 %v2519
          %v2809 = vunpack.c.l.b16 %v2520
          %v2810 = vunpack.c.l.b16 %v2521
          %v2811 = vunpack.c.l.b16 %v2522
          %v2812 = vunpack.c.l.b16 %v2523
          %v2813 = vunpack.c.l.b16 %v2524
          %v2814 = vunpack.c.l.b16 %v2525
          %v2815 = vunpack.c.l.b16 %v2526
          %v2816 = vunpack.c.l.b16 %v2527
          %v2817 = vunpack.c.l.b16 %v2528
          %v2818 = vunpack.c.l.b16 %v2529
          %v2819 = vunpack.c.l.b16 %v2530
          %v2820 = vunpack.c.l.b16 %v2531
          %v2821 = vunpack.c.l.b16 %v2532
          %v2822 = vunpack.c.l.b16 %v2533
          %v2823 = vunpack.c.l.b16 %v2534
          %v2824 = vunpack.c.l.b16 %v2535
          %v2825 = vunpack.c.l.b16 %v2536
          %v2826 = vunpack.c.l.b16 %v2537
          %v2827 = vunpack.c.l.b16 %v2538
          %v2828 = vunpack.c.l.b16 %v2539
          %v2829 = vunpack.c.l.b16 %v2540
          %v2830 = vunpack.c.l.b16 %v2541
          %v2831 = vunpack.c.l.b16 %v2542
          %v2832 = vunpack.c.l.b16 %v2543
          %v2833 = vunpack.c.l.b16 %v2544
          %v2834 = vunpack.c.l.b16 %v2545
          %v2835 = vunpack.c.l.b16 %v2546
          %v2836 = vunpack.c.l.b16 %v2547
          %v2837 = vunpack.c.l.b16 %v2548
          %v2838 = vunpack.c.l.b16 %v2549
          %v2839 = vunpack.c.l.b16 %v2550
          %v2840 = vunpack.c.l.b16 %v2551
          %v2841 = vunpack.c.l.b16 %v2552
          %v2842 = vunpack.c.l.b16 %v2553
          %v2843 = vunpack.c.l.b16 %v2554
          %v2844 = vunpack.c.l.b16 %v2555
          %v2845 = vunpack.c.l.b16 %v2556
          %v2846 = vunpack.c.l.b16 %v2557
          %v2847 = vunpack.c.l.b16 %v2558
          %v2848 = vunpack.c.l.b16 %v2559
          %v2849 = vunpack.c.l.b16 %v2560
          %v2850 = vunpack.c.l.b16 %v2561
          %v2851 = vunpack.c.l.b16 %v2562
          %v2852 = vunpack.c.l.b16 %v2563
          %v2853 = vunpack.c.l.b16 %v2564
          %v2854 = vunpack.c.l.b16 %v2565
          %v2855 = vunpack.c.l.b16 %v2566
          %v2856 = vunpack.c.l.b16 %v2567
          %v2857 = vunpack.c.l.b16 %v2568
          %v2858 = vunpack.c.l.b16 %v2569
          %v2859 = vunpack.c.l.b16 %v2570
          %v2860 = vunpack.c.l.b16 %v2571
          %v2861 = vunpack.c.l.b16 %v2572
          %v2862 = vunpack.c.l.b16 %v2573
          %v2863 = vunpack.c.l.b16 %v2574
          %v2864 = vunpack.c.l.b16 %v2575
          %v2865 = vunpack.c.l.b16 %v2576
          %v2866 = vunpack.c.l.b16 %v2577
          %v2867 = vunpack.c.l.b16 %v2578
          %v2868 = vunpack.c.l.b16 %v2579
          %v2869 = vunpack.c.l.b16 %v2580
          %v2870 = vunpack.c.l.b16 %v2581
          %v2871 = vunpack.c.l.b16 %v2582
          %v2872 = vunpack.c.l.b16 %v2583
          %v2873 = vunpack.c.l.b16 %v2584
          %v2874 = vpack.c.b16 %v2731, %v2730
          %v2875 = vpack.c.b16 %v2733, %v2732
          %v2876 = vpack.c.b16 %v2735, %v2734
          %v2877 = vpack.c.b16 %v2737, %v2736
          %v2878 = vpack.c.b16 %v2739, %v2738
          %v2879 = vpack.c.b16 %v2741, %v2740
          %v2880 = vpack.c.b16 %v2743, %v2742
          %v2881 = vpack.c.b16 %v2745, %v2744
          %v2882 = vpack.c.b16 %v2747, %v2746
          %v2883 = vpack.c.b16 %v2749, %v2748
          %v2884 = vpack.c.b16 %v2751, %v2750
          %v2885 = vpack.c.b16 %v2753, %v2752
          %v2886 = vpack.c.b16 %v2755, %v2754
          %v2887 = vpack.c.b16 %v2757, %v2756
          %v2888 = vpack.c.b16 %v2759, %v2758
          %v2889 = vpack.c.b16 %v2761, %v2760
          %v2890 = vpack.c.b16 %v2763, %v2762
          %v2891 = vpack.c.b16 %v2765, %v2764
          %v2892 = vpack.c.b16 %v2767, %v2766
          %v2893 = vpack.c.b16 %v2769, %v2768
          %v2894 = vpack.c.b16 %v2771, %v2770
          %v2895 = vpack.c.b16 %v2773, %v2772
          %v2896 = vpack.c.b16 %v2775, %v2774
          %v2897 = vpack.c.b16 %v2777, %v2776
          %v2898 = vpack.c.b16 %v2779, %v2778
          %v2899 = vpack.c.b16 %v2781, %v2780
          %v2900 = vpack.c.b16 %v2783, %v2782
          %v2901 = vpack.c.b16 %v2785, %v2784
          %v2902 = vpack.c.b16 %v2787, %v2786
          %v2903 = vpack.c.b16 %v2789, %v2788
          %v2904 = vpack.c.b16 %v2791, %v2790
          %v2905 = vpack.c.b16 %v2793, %v2792
          %v2906 = vpack.c.b16 %v2795, %v2794
          %v2907 = vpack.c.b16 %v2797, %v2796
          %v2908 = vpack.c.b16 %v2799, %v2798
          %v2909 = vpack.c.b16 %v2801, %v2800
          %v2910 = vpack.c.b16 %v2803, %v2802
          %v2911 = vpack.c.b16 %v2805, %v2804
          %v2912 = vpack.c.b16 %v2807, %v2806
          %v2913 = vpack.c.b16 %v2809, %v2808
          %v2914 = vpack.c.b16 %v2811, %v2810
          %v2915 = vpack.c.b16 %v2813, %v2812
          %v2916 = vpack.c.b16 %v2815, %v2814
          %v2917 = vpack.c.b16 %v2817, %v2816
          %v2918 = vpack.c.b16 %v2819, %v2818
          %v2919 = vpack.c.b16 %v2821, %v2820
          %v2920 = vpack.c.b16 %v2823, %v2822
          %v2921 = vpack.c.b16 %v2825, %v2824
          %v2922 = vpack.c.b16 %v2827, %v2826
          %v2923 = vpack.c.b16 %v2829, %v2828
          %v2924 = vpack.c.b16 %v2831, %v2830
          %v2925 = vpack.c.b16 %v2833, %v2832
          %v2926 = vpack.c.b16 %v2835, %v2834
          %v2927 = vpack.c.b16 %v2837, %v2836
          %v2928 = vpack.c.b16 %v2839, %v2838
          %v2929 = vpack.c.b16 %v2841, %v2840
          %v2930 = vpack.c.b16 %v2843, %v2842
          %v2931 = vpack.c.b16 %v2845, %v2844
          %v2932 = vpack.c.b16 %v2847, %v2846
          %v2933 = vpack.c.b16 %v2849, %v2848
          %v2934 = vpack.c.b16 %v2851, %v2850
          %v2935 = vpack.c.b16 %v2853, %v2852
          %v2936 = vpack.c.b16 %v2855, %v2854
          %v2937 = vpack.c.b16 %v2857, %v2856
          %v2938 = vpack.c.b16 %v2859, %v2858
          %v2939 = vpack.c.b16 %v2861, %v2860
          %v2940 = vpack.c.b16 %v2863, %v2862
          %v2941 = vpack.c.b16 %v2865, %v2864
          %v2942 = vpack.c.b16 %v2867, %v2866
          %v2943 = vpack.c.b16 %v2869, %v2868
          %v2944 = vpack.c.b16 %v2871, %v2870
          %v2945 = vpack.c.b16 %v2873, %v2872
          %3018 = vmatpush.bf16.msra.mxu0 %v2881
          %3019 = vmatpush.bf16.msra.mxu0 %v2880
          %3020 = vmatpush.bf16.msra.mxu0 %v2879
          %3021 = vmatpush.bf16.msra.mxu0 %v2878
          %3022 = vmatpush.bf16.msra.mxu0 %v2877
          %3023 = vmatpush.bf16.msra.mxu0 %v2876
          %3024 = vmatpush.bf16.msra.mxu0 %v2875
          %3025 = vmatpush.bf16.msra.mxu0 %v2874
          %3026 = vmatmul.bf16.gmra.mxu0 %v2432
          %v3027 = vpop.f32.mrf.mxu0
          %v3028 = vadd.f32 %v2585, %v3027
          %v3029 = vpop.f32.mrf.mxu0
          %3030 = vdwg.mxu0
          %3031 = vmatpush.bf16.msra.mxu0 %v2889
          %3032 = vmatpush.bf16.msra.mxu0 %v2888
          %3033 = vmatpush.bf16.msra.mxu0 %v2887
          %3034 = vmatpush.bf16.msra.mxu0 %v2886
          %3035 = vmatpush.bf16.msra.mxu0 %v2885
          %3036 = vmatpush.bf16.msra.mxu0 %v2884
          %3037 = vmatpush.bf16.msra.mxu0 %v2883
          %3038 = vmatpush.bf16.msra.mxu0 %v2882
          %3039 = vmatmul.bf16.gmra.mxu0 %v2433
          %v3040 = vpop.f32.mrf.mxu0
          %v3041 = vadd.f32 %v3028, %v3040
          %v3042 = vpop.f32.mrf.mxu0
          %3043 = vdwg.mxu0
          %3044 = vmatpush.bf16.msra.mxu0 %v2897
          %3045 = vmatpush.bf16.msra.mxu0 %v2896
          %3046 = vmatpush.bf16.msra.mxu0 %v2895
          %3047 = vmatpush.bf16.msra.mxu0 %v2894
          %3048 = vmatpush.bf16.msra.mxu0 %v2893
          %3049 = vmatpush.bf16.msra.mxu0 %v2892
          %3050 = vmatpush.bf16.msra.mxu0 %v2891
          %3051 = vmatpush.bf16.msra.mxu0 %v2890
          %3052 = vmatmul.bf16.gmra.mxu0 %v2434
          %v3053 = vpop.f32.mrf.mxu0
          %v3054 = vadd.f32 %v3041, %v3053
          %v3055 = vpop.f32.mrf.mxu0
          %3056 = vdwg.mxu0
          %3057 = vmatpush.bf16.msra.mxu0 %v2905
          %3058 = vmatpush.bf16.msra.mxu0 %v2904
          %3059 = vmatpush.bf16.msra.mxu0 %v2903
          %3060 = vmatpush.bf16.msra.mxu0 %v2902
          %3061 = vmatpush.bf16.msra.mxu0 %v2901
          %3062 = vmatpush.bf16.msra.mxu0 %v2900
          %3063 = vmatpush.bf16.msra.mxu0 %v2899
          %3064 = vmatpush.bf16.msra.mxu0 %v2898
          %3065 = vmatmul.bf16.gmra.mxu0 %v2435
          %v3066 = vpop.f32.mrf.mxu0
          %v3067 = vadd.f32 %v3054, %v3066
          %v3068 = vpop.f32.mrf.mxu0
          %3069 = vdwg.mxu0
          %3070 = vmatpush.bf16.msra.mxu0 %v2913
          %3071 = vmatpush.bf16.msra.mxu0 %v2912
          %3072 = vmatpush.bf16.msra.mxu0 %v2911
          %3073 = vmatpush.bf16.msra.mxu0 %v2910
          %3074 = vmatpush.bf16.msra.mxu0 %v2909
          %3075 = vmatpush.bf16.msra.mxu0 %v2908
          %3076 = vmatpush.bf16.msra.mxu0 %v2907
          %3077 = vmatpush.bf16.msra.mxu0 %v2906
          %3078 = vmatmul.bf16.gmra.mxu0 %v2436
          %v3079 = vpop.f32.mrf.mxu0
          %v3080 = vadd.f32 %v3067, %v3079
          %v3081 = vpop.f32.mrf.mxu0
          %3082 = vdwg.mxu0
          %3083 = vmatpush.bf16.msra.mxu0 %v2921
          %3084 = vmatpush.bf16.msra.mxu0 %v2920
          %3085 = vmatpush.bf16.msra.mxu0 %v2919
          %3086 = vmatpush.bf16.msra.mxu0 %v2918
          %3087 = vmatpush.bf16.msra.mxu0 %v2917
          %3088 = vmatpush.bf16.msra.mxu0 %v2916
          %3089 = vmatpush.bf16.msra.mxu0 %v2915
          %3090 = vmatpush.bf16.msra.mxu0 %v2914
          %3091 = vmatmul.bf16.gmra.mxu0 %v2437
          %v3092 = vpop.f32.mrf.mxu0
          %v3093 = vadd.f32 %v3080, %v3092
          %v3094 = vpop.f32.mrf.mxu0
          %3095 = vdwg.mxu0
          %3096 = vmatpush.bf16.msra.mxu0 %v2929
          %3097 = vmatpush.bf16.msra.mxu0 %v2928
          %3098 = vmatpush.bf16.msra.mxu0 %v2927
          %3099 = vmatpush.bf16.msra.mxu0 %v2926
          %3100 = vmatpush.bf16.msra.mxu0 %v2925
          %3101 = vmatpush.bf16.msra.mxu0 %v2924
          %3102 = vmatpush.bf16.msra.mxu0 %v2923
          %3103 = vmatpush.bf16.msra.mxu0 %v2922
          %3104 = vmatmul.bf16.gmra.mxu0 %v2438
          %v3105 = vpop.f32.mrf.mxu0
          %v3106 = vadd.f32 %v3093, %v3105
          %v3107 = vpop.f32.mrf.mxu0
          %3108 = vdwg.mxu0
          %3109 = vmatpush.bf16.msra.mxu0 %v2937
          %3110 = vmatpush.bf16.msra.mxu0 %v2936
          %3111 = vmatpush.bf16.msra.mxu0 %v2935
          %3112 = vmatpush.bf16.msra.mxu0 %v2934
          %3113 = vmatpush.bf16.msra.mxu0 %v2933
          %3114 = vmatpush.bf16.msra.mxu0 %v2932
          %3115 = vmatpush.bf16.msra.mxu0 %v2931
          %3116 = vmatpush.bf16.msra.mxu0 %v2930
          %3117 = vmatmul.bf16.gmra.mxu0 %v2439
          %v3118 = vpop.f32.mrf.mxu0
          %v3119 = vadd.f32 %v3106, %v3118
          %v3120 = vpop.f32.mrf.mxu0
          %3121 = vdwg.mxu0
          %3122 = vmatpush.bf16.msra.mxu0 %v2945
          %3123 = vmatpush.bf16.msra.mxu0 %v2944
          %3124 = vmatpush.bf16.msra.mxu0 %v2943
          %3125 = vmatpush.bf16.msra.mxu0 %v2942
          %3126 = vmatpush.bf16.msra.mxu0 %v2941
          %3127 = vmatpush.bf16.msra.mxu0 %v2940
          %3128 = vmatpush.bf16.msra.mxu0 %v2939
          %3129 = vmatpush.bf16.msra.mxu0 %v2938
          %3130 = vmatmul.bf16.gmra.mxu0 %v2440
          %v3131 = vpop.f32.mrf.mxu0
          %v3132 = vadd.f32 %v3119, %v3131
          %v3133 = vpop.f32.mrf.mxu0
          %3134 = vdwg.mxu0
          %vm3135 = vcmask 32768
          %3136 = vst.msk [vmem:[#allocation14] sm:$0x1] %vm3135, %v3132
        $region80: #{tpu_custom_call.1} parent=47 // pred_fallthru
          _
        // Predicated region
        $region81: #{tpu_custom_call.1} parent=47 // pred_check
          %p3137 = pneg %p224
        $region82: #{tpu_custom_call.1} parent=47 // pred_check_branch
          %3139 = sbr.rel (%p3137) target = $region84
        $region83: #{tpu_custom_call.1} parent=47 // pred_region
          %3141 = vsyncadd [#allocation5], 0
          %s3142 = scalar_lea.hbm %s7, %s31
          %s3144 = sshll.u32 [#allocation14], 4
          %s3145 = int_to_ptr.vmem [resolvable:$true] %s3144
          %s3146 = sshll.u32 %s3142, 4
          %s3147 = int_to_ptr.hbm [resolvable:$true] %s3146
          %3149 = dma.vmem_to_hbm [thread:$0]  %s3145, 16, %s3147, [#allocation5]
        $region84: #{tpu_custom_call.1} parent=47 // pred_fallthru
          _
        // Predicated region
        $region85: #{tpu_custom_call.1} parent=47 // pred_check
          %p3150 = pneg %p224
        $region86: #{tpu_custom_call.1} parent=47 // pred_check_branch
          %3152 = sbr.rel (%p3150) target = $region88
        $region87: #{tpu_custom_call.1} parent=47 // pred_region
          %3154 = dma.done [#allocation5], 16
        $region88: #{tpu_custom_call.1} parent=47 // pred_fallthru
          _
      $region48: #{tpu_custom_call.1} parent=5 // pred_fallthru
        _
      %p3155 = scmp.le.s32.totalorder 2, %s22
      // Predicated region
      $region89: #{tpu_custom_call.1} parent=5 // pred_check
        %p3156 = pneg %p3155
      $region90: #{tpu_custom_call.1} parent=5 // pred_check_branch
        %3158 = sbr.rel (%p3156) target = $region92
      $region91: #{tpu_custom_call.1} parent=5 // pred_region
        %s3159 = ssub.s32 %s22, 2
      $region92: #{tpu_custom_call.1} parent=5 // pred_fallthru
        _
    $region6: #{tpu_custom_call.1} parent=1 // loop_footer
      %s26 = sadd.s32 1, %s22
    $region7: #{tpu_custom_call.1} parent=1 // loop_footer_branch
      %21 = sbr.rel target = $region3
    $region8: #{tpu_custom_call.1} parent=1 // loop_exit
      _
    %3160 = vsyncpa [#allocation4], 1
    %s3161 = scalar_lea.sflag [#allocation4], 1
    %3162 = vsyncpa %s3161, 1
    %3163 = vsyncpa [#allocation7], 1
    %s3164 = scalar_lea.sflag [#allocation7], 1
    %3165 = vsyncpa %s3164, 1
    %3166 = vsyncpa [#allocation10], 1
    %s3167 = scalar_lea.sflag [#allocation10], 1
    %3168 = vsyncpa %s3167, 1
    %3169 = vsyncpa [#allocation13], 1
    %3170 = vsyncpa [#allocation5], 1
    %s3171 = scalar_lea.sflag [#allocation5], 1
    %3172 = vsyncpa %s3171, 1

</llo_original>
